<compile_context>
chip_gen: v7x
topology: tpu7x:2x2x1
jax: 0.10.0
libtpu: 0.0.40
codegen_flags: <defaults>
</compile_context>

<pallas_src>
import jax
import jax.numpy as jnp
from jax.experimental import pallas as pl
from jax.experimental.pallas import tpu as pltpu

BN_EPS = 1e-5


def _round_up(x, m):
    return (x + m - 1) // m * m


def _k_tiling(k, block_k):
    """Largest lane-aligned K-tile <= block_k, and the padded K it implies."""
    bk = min(block_k, _round_up(k, 128))
    return bk, _round_up(k, bk)


def _fused_simsiam_kernel(x1_ref, x2_ref, enc_w_ref, w1_ref, g_ref, b_ref,
                          w2_ref, z1_ref, z2_ref, p1_ref, p2_ref,
                          acc1_ref, acc2_ref):
    """K-tiled fused forward for both views.

    x1_ref/x2_ref : (B, tk)  f32   K-tile of each view's flattened image
    enc_w_ref     : (tk, D)  bf16  K-tile of encoder projection weight
    w1_ref        : (D, Pp)  bf16  predictor linear1 weight (transposed, padded)
    g_ref, b_ref  : (1, Pp)  f32   BN2 gamma / beta (padded lanes = 0)
    w2_ref        : (Pp, D)  bf16  predictor linear2 weight (transposed, padded)
    z*_ref, p*_ref: (B, D)   f32   SimSiam target z / predictor output p
    acc*_ref      : (B, D)   f32   per-view encoder matmul accumulators
    """
    k = pl.program_id(0)

    @pl.when(k == 0)
    def _init():
        acc1_ref[...] = jnp.zeros_like(acc1_ref)
        acc2_ref[...] = jnp.zeros_like(acc2_ref)

    # Encoder stand-in: K-tiled bf16 MXU matmul with f32 accumulation.
    # enc_w tile is DMA'd HBM->VMEM exactly once and reused for both views.
    w_tile = enc_w_ref[...]
    acc1_ref[...] += jnp.dot(x1_ref[...].astype(w_tile.dtype), w_tile,
                             preferred_element_type=jnp.float32)
    acc2_ref[...] += jnp.dot(x2_ref[...].astype(w_tile.dtype), w_tile,
                             preferred_element_type=jnp.float32)

    @pl.when(k == pl.num_programs(0) - 1)
    def _finalize():
        gamma = g_ref[...]
        beta = b_ref[...]
        w1 = w1_ref[...]
        w2 = w2_ref[...]

        def one_view(acc_ref, z_ref, p_ref):
            feat = acc_ref[...]                                   # (B, D) f32
            # ---- BatchNorm1d(out_dim, affine=False), training=True ----
            mu = jnp.mean(feat, axis=0, keepdims=True)
            var = jnp.mean((feat - mu) ** 2, axis=0, keepdims=True)  # biased
            z = (feat - mu) * jax.lax.rsqrt(var + BN_EPS)
            z_ref[...] = z.astype(z_ref.dtype)

            # ---- MetaPredictor: linear1 -> BN(affine) -> ReLU -> linear2 ----
            h = jnp.dot(z.astype(w1.dtype), w1,
                        preferred_element_type=jnp.float32)          # (B, Pp)
            mu2 = jnp.mean(h, axis=0, keepdims=True)
            var2 = jnp.mean((h - mu2) ** 2, axis=0, keepdims=True)
            hn = (h - mu2) * jax.lax.rsqrt(var2 + BN_EPS) * gamma + beta
            hn = jnp.maximum(hn, 0.0)
            p = jnp.dot(hn.astype(w2.dtype), w2,
                        preferred_element_type=jnp.float32)          # (B, D)
            p_ref[...] = p.astype(p_ref.dtype)

        one_view(acc1_ref, z1_ref, p1_ref)
        one_view(acc2_ref, z2_ref, p2_ref)


def _vmem_cap_bytes():
    """Generation-aware VMEM cap (~48 MiB on v7x, ~96 MiB on v5e/v6e)."""
    cap = 64 << 20
    try:
        info = pltpu.get_tpu_info()
        cap = int(getattr(info, "vmem_capacity_bytes", cap))
    except Exception:
        pass
    return (cap * 3) // 4


def meta_simsiam_forward(x1, x2, params, *, block_k=2048):
    """x1, x2: (B, C, H, W) float32. Returns (p1, p2, z1, z2)."""
    B = x1.shape[0]
    assert B % 8 == 0, "batch must be a multiple of 8 (sublane-dense tiles)"

    x1f = x1.reshape(B, -1)                       # free layout plumbing
    x2f = x2.reshape(B, -1)
    K = x1f.shape[1]

    enc_w = params["enc_w_bf"]                    # (Kp, D)  bf16, pre-padded
    w1 = params["w1_t_bf"]                        # (D, Pp)  bf16
    gamma = params["bn_gamma"]                    # (1, Pp)  f32
    beta = params["bn_beta"]                      # (1, Pp)  f32
    w2 = params["w2_t_bf"]                        # (Pp, D)  bf16
    Kp, D = enc_w.shape
    Pp = w1.shape[1]

    bk, Kp_expected = _k_tiling(K, block_k)
    assert bk % 128 == 0
    assert Kp == Kp_expected, (
        "enc_w K-padding does not match block_k; build params with the same "
        "block_k passed to meta_simsiam_forward")

    # Only x needs a (cheap, B*(Kp-K)*4 B) pad when K is ragged; enc_w's padded
    # rows are zero so the padded x columns contribute exactly nothing.
    if Kp != K:
        x1f = jnp.pad(x1f, ((0, 0), (0, Kp - K)))
        x2f = jnp.pad(x2f, ((0, 0), (0, Kp - K)))

    kt = Kp // bk

    # VMEM budget (double-buffered streamed tiles + resident weights + outs).
    x_blk = 2 * B * bk * 4                        # both views, f32 tiles
    w_blk = bk * D * 2                            # enc_w bf16 tile
    resident = (D * Pp + Pp * D) * 2 + 2 * Pp * 4
    outs = 4 * B * D * 4
    acc = 2 * B * D * 4
    budget = 2 * (x_blk + w_blk) + 2 * resident + 2 * outs + acc
    vmem_limit = int(min(max(2 * budget, 16 << 20), _vmem_cap_bytes()))

    cost = pl.CostEstimate(
        flops=2 * (2 * B) * Kp * D + 2 * (2 * B) * D * Pp + 2 * (2 * B) * Pp * D,
        transcendentals=2 * (D + Pp),
        bytes_accessed=(2 * B * Kp * 4 + Kp * D * 2 + 2 * D * Pp * 2
                        + 2 * Pp * 4 + 4 * B * D * 4),
    )

    z1, z2, p1, p2 = pl.pallas_call(
        _fused_simsiam_kernel,
        out_shape=(jax.ShapeDtypeStruct((B, D), jnp.float32),
                   jax.ShapeDtypeStruct((B, D), jnp.float32),
                   jax.ShapeDtypeStruct((B, D), jnp.float32),
                   jax.ShapeDtypeStruct((B, D), jnp.float32)),
        grid_spec=pltpu.PrefetchScalarGridSpec(
            num_scalar_prefetch=0,
            grid=(kt,),
            in_specs=[
                pl.BlockSpec((B, bk), lambda k: (0, k)),     # x1 tile (f32)
                pl.BlockSpec((B, bk), lambda k: (0, k)),     # x2 tile (f32)
                pl.BlockSpec((bk, D), lambda k: (k, 0)),     # enc_w tile (bf16)
                pl.BlockSpec((D, Pp), lambda k: (0, 0)),     # w1 (resident)
                pl.BlockSpec((1, Pp), lambda k: (0, 0)),     # gamma
                pl.BlockSpec((1, Pp), lambda k: (0, 0)),     # beta
                pl.BlockSpec((Pp, D), lambda k: (0, 0)),     # w2 (resident)
            ],
            out_specs=(pl.BlockSpec((B, D), lambda k: (0, 0)),
                       pl.BlockSpec((B, D), lambda k: (0, 0)),
                       pl.BlockSpec((B, D), lambda k: (0, 0)),
                       pl.BlockSpec((B, D), lambda k: (0, 0))),
            scratch_shapes=[pltpu.VMEM((B, D), jnp.float32),
                            pltpu.VMEM((B, D), jnp.float32)],
        ),
        compiler_params=pltpu.CompilerParams(
            dimension_semantics=("arbitrary",),              # K is a reduction
            vmem_limit_bytes=vmem_limit,
        ),
        cost_estimate=cost,
    )(x1f, x2f, enc_w, w1, gamma, beta, w2)

    # z1/z2 are .detach()'d in PyTorch; forward values identical.
    return p1, p2, jax.lax.stop_gradient(z1), jax.lax.stop_gradient(z2)


def _reference_view(xv_f32, enc_w_bf, w1_bf, gamma, beta, w2_bf):
    """Pure-JAX reference mirroring the kernel's bf16 matmul operands."""
    feat = jnp.dot(xv_f32.astype(jnp.bfloat16), enc_w_bf,
                   preferred_element_type=jnp.float32)
    mu = feat.mean(0, keepdims=True)
    var = ((feat - mu) ** 2).mean(0, keepdims=True)
    z = (feat - mu) * jax.lax.rsqrt(var + BN_EPS)
    h = jnp.dot(z.astype(jnp.bfloat16), w1_bf, preferred_element_type=jnp.float32)
    mu2 = h.mean(0, keepdims=True)
    var2 = ((h - mu2) ** 2).mean(0, keepdims=True)
    hn = (h - mu2) * jax.lax.rsqrt(var2 + BN_EPS) * gamma + beta
    hn = jnp.maximum(hn, 0.0)
    p = jnp.dot(hn.astype(jnp.bfloat16), w2_bf, preferred_element_type=jnp.float32)
    return z, p


def make_params(key, in_features, out_dim=128, pred_dim=64, *, block_k=2048):
    """Stores weights padded + bf16-cast ONCE so the forward never re-pads/casts."""
    k_enc, k1, k2 = jax.random.split(key, 3)
    pred_pad = _round_up(pred_dim, 128)               # lane-dense predictor dim
    pad = pred_pad - pred_dim
    _, Kp = _k_tiling(in_features, block_k)

    # Encoder stand-in weight, stored (Kp, out_dim) bf16 for x @ W; padded
    # K-rows are zero so padded x columns are exact no-ops.
    enc_w = (jax.random.normal(k_enc, (in_features, out_dim), jnp.float32)
             * (1.0 / jnp.sqrt(in_features)))
    enc_w_bf = jnp.pad(enc_w, ((0, Kp - in_features), (0, 0))).astype(jnp.bfloat16)

    # MetaPredictor linear1: torch weight (pred_dim, out_dim), kaiming_normal
    # (fan_in = out_dim).  Stored transposed, zero-padded, bf16: (out_dim, Pp).
    w1 = (jax.random.normal(k1, (pred_dim, out_dim), jnp.float32)
          * jnp.sqrt(2.0 / out_dim))
    # MetaPredictor linear2: torch weight (out_dim, pred_dim), fan_in = pred_dim.
    w2 = (jax.random.normal(k2, (out_dim, pred_dim), jnp.float32)
          * jnp.sqrt(2.0 / pred_dim))
    w1_t_bf = jnp.pad(w1.T, ((0, 0), (0, pad))).astype(jnp.bfloat16)
    w2_t_bf = jnp.pad(w2.T, ((0, pad), (0, 0))).astype(jnp.bfloat16)

    # gamma/beta padded lanes are 0 so padded predictor columns stay exactly 0.
    gamma = jnp.pad(jnp.ones((1, pred_dim), jnp.float32), ((0, 0), (0, pad)))
    beta = jnp.zeros((1, pred_pad), jnp.float32)
    return {"enc_w_bf": enc_w_bf, "w1_t_bf": w1_t_bf,
            "bn_gamma": gamma, "bn_beta": beta, "w2_t_bf": w2_t_bf}


if __name__ == "__main__":
    key = jax.random.PRNGKey(0)
    kx1, kx2, kp = jax.random.split(key, 3)

    B, C, H, W = 8, 3, 16, 16                 # small NCHW images
    out_dim, pred_dim = 128, 64
    block_k = 2048

    x1 = jax.random.normal(kx1, (B, C, H, W), jnp.float32)
    x2 = jax.random.normal(kx2, (B, C, H, W), jnp.float32)
    params = make_params(kp, C * H * W, out_dim, pred_dim, block_k=block_k)

    fwd = jax.jit(lambda a, b, p: meta_simsiam_forward(a, b, p, block_k=block_k))
    p1, p2, z1, z2 = fwd(x1, x2, params)
    jax.block_until_ready((p1, p2, z1, z2))

    # Sanity check against a pure-JAX reference with identical bf16 operands.
    K = C * H * W
    enc_bf = params["enc_w_bf"][:K]           # padded rows are zero; slice = same
    z1_ref, p1_ref = _reference_view(x1.reshape(B, -1), enc_bf,
                                     params["w1_t_bf"], params["bn_gamma"],
                                     params["bn_beta"], params["w2_t_bf"])
    z2_ref, p2_ref = _reference_view(x2.reshape(B, -1), enc_bf,
                                     params["w1_t_bf"], params["bn_gamma"],
                                     params["bn_beta"], params["w2_t_bf"])

    assert jnp.allclose(z1, z1_ref, atol=2e-2, rtol=2e-2)
    assert jnp.allclose(z2, z2_ref, atol=2e-2, rtol=2e-2)
    assert jnp.allclose(p1, p1_ref, atol=2e-2, rtol=2e-2)
    assert jnp.allclose(p2, p2_ref, atol=2e-2, rtol=2e-2)

    print("KERNEL_OK")
</pallas_src>

<mosaic_0001>
module attributes {stable_mosaic.version = 11 : i64} {
  func.func @_fused_simsiam_kernel(%arg0: i32, %arg1: memref<8x768xf32, #tpu.memory_space<vmem>>, %arg2: memref<8x768xf32, #tpu.memory_space<vmem>>, %arg3: memref<768x128xbf16, #tpu.memory_space<vmem>>, %arg4: memref<128x128xbf16, #tpu.memory_space<vmem>>, %arg5: memref<1x128xf32, #tpu.memory_space<vmem>>, %arg6: memref<1x128xf32, #tpu.memory_space<vmem>>, %arg7: memref<128x128xbf16, #tpu.memory_space<vmem>>, %arg8: memref<8x128xf32, #tpu.memory_space<vmem>>, %arg9: memref<8x128xf32, #tpu.memory_space<vmem>>, %arg10: memref<8x128xf32, #tpu.memory_space<vmem>>, %arg11: memref<8x128xf32, #tpu.memory_space<vmem>>, %arg12: memref<8x128xf32, #tpu.memory_space<vmem>>, %arg13: memref<8x128xf32, #tpu.memory_space<vmem>>) attributes {dimension_semantics = [#tpu.dimension_semantics<arbitrary>], iteration_bounds = array<i64: 1>, scalar_prefetch = 0 : i64, scratch_operands = 2 : i64, tpu.core_type = #tpu.core_type<tc>, window_params = [{transform_indices = @transform_0, window_bounds = array<i64: 8, 768>}, {transform_indices = @transform_1, window_bounds = array<i64: 8, 768>}, {transform_indices = @transform_2, window_bounds = array<i64: 768, 128>}, {pipeline_mode = #tpu.pipeline_mode<synchronous>, transform_indices = @transform_3, window_bounds = array<i64: 128, 128>}, {pipeline_mode = #tpu.pipeline_mode<synchronous>, transform_indices = @transform_4, window_bounds = array<i64: 1, 128>}, {pipeline_mode = #tpu.pipeline_mode<synchronous>, transform_indices = @transform_5, window_bounds = array<i64: 1, 128>}, {pipeline_mode = #tpu.pipeline_mode<synchronous>, transform_indices = @transform_6, window_bounds = array<i64: 128, 128>}, {pipeline_mode = #tpu.pipeline_mode<synchronous>, transform_indices = @transform_7, window_bounds = array<i64: 8, 128>}, {pipeline_mode = #tpu.pipeline_mode<synchronous>, transform_indices = @transform_8, window_bounds = array<i64: 8, 128>}, {pipeline_mode = #tpu.pipeline_mode<synchronous>, transform_indices = @transform_9, window_bounds = array<i64: 8, 128>}, {pipeline_mode = #tpu.pipeline_mode<synchronous>, transform_indices = @transform_10, window_bounds = array<i64: 8, 128>}]} {
    %c0_i32 = arith.constant 0 : i32
    %0 = arith.cmpi eq, %arg0, %c0_i32 : i32
    %1 = arith.extui %0 : i1 to i32
    %c0_i32_0 = arith.constant 0 : i32
    %2 = arith.cmpi ne, %1, %c0_i32_0 : i32
    scf.if %2 {
      %cst_17 = arith.constant 0.000000e+00 : f32
      %19 = vector.broadcast %cst_17 : f32 to vector<8x128xf32>
      %c0_18 = arith.constant 0 : index
      %c0_19 = arith.constant 0 : index
      %20 = vector.load %arg12[%c0_18, %c0_19] : memref<8x128xf32, #tpu.memory_space<vmem>>, vector<8x128xf32>
      tpu.vector_store %arg12[%c0_18, %c0_19], %19 {strides = array<i32>} : memref<8x128xf32, #tpu.memory_space<vmem>>, vector<8x128xf32>,
      %cst_20 = arith.constant 0.000000e+00 : f32
      %21 = vector.broadcast %cst_20 : f32 to vector<8x128xf32>
      %c0_21 = arith.constant 0 : index
      %c0_22 = arith.constant 0 : index
      %22 = vector.load %arg13[%c0_21, %c0_22] : memref<8x128xf32, #tpu.memory_space<vmem>>, vector<8x128xf32>
      tpu.vector_store %arg13[%c0_21, %c0_22], %21 {strides = array<i32>} : memref<8x128xf32, #tpu.memory_space<vmem>>, vector<8x128xf32>,
    } else {
    }
    %c0 = arith.constant 0 : index
    %c0_1 = arith.constant 0 : index
    %3 = vector.load %arg3[%c0, %c0_1] : memref<768x128xbf16, #tpu.memory_space<vmem>>, vector<768x128xbf16>
    %c0_2 = arith.constant 0 : index
    %c0_3 = arith.constant 0 : index
    %4 = vector.load %arg12[%c0_2, %c0_3] : memref<8x128xf32, #tpu.memory_space<vmem>>, vector<8x128xf32>
    %c0_4 = arith.constant 0 : index
    %c0_5 = arith.constant 0 : index
    %5 = vector.load %arg1[%c0_4, %c0_5] : memref<8x768xf32, #tpu.memory_space<vmem>>, vector<8x768xf32>
    %6 = arith.truncf %5 : vector<8x768xf32> to vector<8x768xbf16>
    %cst = arith.constant dense<0.000000e+00> : vector<8x128xf32>
    %7 = tpu.matmul %6, %3, %cst {dimension_numbers = #tpu.dot_dimension_numbers<[1], [0], [0], [1], [0, 0, 1, 1], [], []>} : vector<8x768xbf16>, vector<768x128xbf16>, vector<8x128xf32> -> vector<8x128xf32>
    %8 = arith.addf %4, %7 : vector<8x128xf32>
    %c0_6 = arith.constant 0 : index
    %c0_7 = arith.constant 0 : index
    %9 = vector.load %arg12[%c0_6, %c0_7] : memref<8x128xf32, #tpu.memory_space<vmem>>, vector<8x128xf32>
    tpu.vector_store %arg12[%c0_6, %c0_7], %8 {strides = array<i32>} : memref<8x128xf32, #tpu.memory_space<vmem>>, vector<8x128xf32>,
    %c0_8 = arith.constant 0 : index
    %c0_9 = arith.constant 0 : index
    %10 = vector.load %arg13[%c0_8, %c0_9] : memref<8x128xf32, #tpu.memory_space<vmem>>, vector<8x128xf32>
    %c0_10 = arith.constant 0 : index
    %c0_11 = arith.constant 0 : index
    %11 = vector.load %arg2[%c0_10, %c0_11] : memref<8x768xf32, #tpu.memory_space<vmem>>, vector<8x768xf32>
    %12 = arith.truncf %11 : vector<8x768xf32> to vector<8x768xbf16>
    %cst_12 = arith.constant dense<0.000000e+00> : vector<8x128xf32>
    %13 = tpu.matmul %12, %3, %cst_12 {dimension_numbers = #tpu.dot_dimension_numbers<[1], [0], [0], [1], [0, 0, 1, 1], [], []>} : vector<8x768xbf16>, vector<768x128xbf16>, vector<8x128xf32> -> vector<8x128xf32>
    %14 = arith.addf %10, %13 : vector<8x128xf32>
    %c0_13 = arith.constant 0 : index
    %c0_14 = arith.constant 0 : index
    %15 = vector.load %arg13[%c0_13, %c0_14] : memref<8x128xf32, #tpu.memory_space<vmem>>, vector<8x128xf32>
    tpu.vector_store %arg13[%c0_13, %c0_14], %14 {strides = array<i32>} : memref<8x128xf32, #tpu.memory_space<vmem>>, vector<8x128xf32>,
    %c0_i32_15 = arith.constant 0 : i32
    %16 = arith.cmpi eq, %arg0, %c0_i32_15 : i32
    %17 = arith.extui %16 : i1 to i32
    %c0_i32_16 = arith.constant 0 : i32
    %18 = arith.cmpi ne, %17, %c0_i32_16 : i32
    scf.if %18 {
      %c0_17 = arith.constant 0 : index
      %c0_18 = arith.constant 0 : index
      %19 = vector.load %arg5[%c0_17, %c0_18] : memref<1x128xf32, #tpu.memory_space<vmem>>, vector<1x128xf32>
      %c0_19 = arith.constant 0 : index
      %c0_20 = arith.constant 0 : index
      %20 = vector.load %arg6[%c0_19, %c0_20] : memref<1x128xf32, #tpu.memory_space<vmem>>, vector<1x128xf32>
      %c0_21 = arith.constant 0 : index
      %c0_22 = arith.constant 0 : index
      %21 = vector.load %arg4[%c0_21, %c0_22] : memref<128x128xbf16, #tpu.memory_space<vmem>>, vector<128x128xbf16>
      %c0_23 = arith.constant 0 : index
      %c0_24 = arith.constant 0 : index
      %22 = vector.load %arg7[%c0_23, %c0_24] : memref<128x128xbf16, #tpu.memory_space<vmem>>, vector<128x128xbf16>
      %c0_25 = arith.constant 0 : index
      %c0_26 = arith.constant 0 : index
      %23 = vector.load %arg12[%c0_25, %c0_26] : memref<8x128xf32, #tpu.memory_space<vmem>>, vector<8x128xf32>
      %cst_27 = arith.constant dense<0.000000e+00> : vector<128xf32>
      %24 = vector.multi_reduction <add>, %23, %cst_27 [0] : vector<8x128xf32> to vector<128xf32>
      %25 = vector.shape_cast %24 : vector<128xf32> to vector<1x128xf32>
      %cst_28 = arith.constant 8.000000e+00 : f32
      %26 = vector.broadcast %cst_28 : f32 to vector<1x128xf32>
      %27 = arith.divf %25, %26 : vector<1x128xf32>
      %28 = vector.broadcast %27 : vector<1x128xf32> to vector<8x128xf32>
      %29 = arith.subf %23, %28 : vector<8x128xf32>
      %30 = arith.mulf %29, %29 : vector<8x128xf32>
      %cst_29 = arith.constant dense<0.000000e+00> : vector<128xf32>
      %31 = vector.multi_reduction <add>, %30, %cst_29 [0] : vector<8x128xf32> to vector<128xf32>
      %32 = vector.shape_cast %31 : vector<128xf32> to vector<1x128xf32>
      %cst_30 = arith.constant 8.000000e+00 : f32
      %33 = vector.broadcast %cst_30 : f32 to vector<1x128xf32>
      %34 = arith.divf %32, %33 : vector<1x128xf32>
      %35 = vector.broadcast %27 : vector<1x128xf32> to vector<8x128xf32>
      %36 = arith.subf %23, %35 : vector<8x128xf32>
      %cst_31 = arith.constant 9.99999974E-6 : f32
      %37 = vector.broadcast %cst_31 : f32 to vector<1x128xf32>
      %38 = arith.addf %34, %37 : vector<1x128xf32>
      %39 = math.rsqrt %38 : vector<1x128xf32>
      %40 = vector.broadcast %39 : vector<1x128xf32> to vector<8x128xf32>
      %41 = arith.mulf %36, %40 : vector<8x128xf32>
      %c0_32 = arith.constant 0 : index
      %c0_33 = arith.constant 0 : index
      %42 = vector.load %arg8[%c0_32, %c0_33] : memref<8x128xf32, #tpu.memory_space<vmem>>, vector<8x128xf32>
      tpu.vector_store %arg8[%c0_32, %c0_33], %41 {strides = array<i32>} : memref<8x128xf32, #tpu.memory_space<vmem>>, vector<8x128xf32>,
      %43 = arith.truncf %41 : vector<8x128xf32> to vector<8x128xbf16>
      %cst_34 = arith.constant dense<0.000000e+00> : vector<8x128xf32>
      %44 = tpu.matmul %43, %21, %cst_34 {dimension_numbers = #tpu.dot_dimension_numbers<[1], [0], [0], [1], [0, 0, 1, 1], [], []>} : vector<8x128xbf16>, vector<128x128xbf16>, vector<8x128xf32> -> vector<8x128xf32>
      %cst_35 = arith.constant dense<0.000000e+00> : vector<128xf32>
      %45 = vector.multi_reduction <add>, %44, %cst_35 [0] : vector<8x128xf32> to vector<128xf32>
      %46 = vector.shape_cast %45 : vector<128xf32> to vector<1x128xf32>
      %cst_36 = arith.constant 8.000000e+00 : f32
      %47 = vector.broadcast %cst_36 : f32 to vector<1x128xf32>
      %48 = arith.divf %46, %47 : vector<1x128xf32>
      %49 = vector.broadcast %48 : vector<1x128xf32> to vector<8x128xf32>
      %50 = arith.subf %44, %49 : vector<8x128xf32>
      %51 = arith.mulf %50, %50 : vector<8x128xf32>
      %cst_37 = arith.constant dense<0.000000e+00> : vector<128xf32>
      %52 = vector.multi_reduction <add>, %51, %cst_37 [0] : vector<8x128xf32> to vector<128xf32>
      %53 = vector.shape_cast %52 : vector<128xf32> to vector<1x128xf32>
      %cst_38 = arith.constant 8.000000e+00 : f32
      %54 = vector.broadcast %cst_38 : f32 to vector<1x128xf32>
      %55 = arith.divf %53, %54 : vector<1x128xf32>
      %56 = vector.broadcast %48 : vector<1x128xf32> to vector<8x128xf32>
      %57 = arith.subf %44, %56 : vector<8x128xf32>
      %cst_39 = arith.constant 9.99999974E-6 : f32
      %58 = vector.broadcast %cst_39 : f32 to vector<1x128xf32>
      %59 = arith.addf %55, %58 : vector<1x128xf32>
      %60 = math.rsqrt %59 : vector<1x128xf32>
      %61 = vector.broadcast %60 : vector<1x128xf32> to vector<8x128xf32>
      %62 = arith.mulf %57, %61 : vector<8x128xf32>
      %63 = vector.broadcast %19 : vector<1x128xf32> to vector<8x128xf32>
      %64 = arith.mulf %62, %63 : vector<8x128xf32>
      %65 = vector.broadcast %20 : vector<1x128xf32> to vector<8x128xf32>
      %66 = arith.addf %64, %65 : vector<8x128xf32>
      %cst_40 = arith.constant 0.000000e+00 : f32
      %67 = vector.broadcast %cst_40 : f32 to vector<8x128xf32>
      %68 = arith.maximumf %66, %67 : vector<8x128xf32>
      %69 = arith.truncf %68 : vector<8x128xf32> to vector<8x128xbf16>
      %cst_41 = arith.constant dense<0.000000e+00> : vector<8x128xf32>
      %70 = tpu.matmul %69, %22, %cst_41 {dimension_numbers = #tpu.dot_dimension_numbers<[1], [0], [0], [1], [0, 0, 1, 1], [], []>} : vector<8x128xbf16>, vector<128x128xbf16>, vector<8x128xf32> -> vector<8x128xf32>
      %c0_42 = arith.constant 0 : index
      %c0_43 = arith.constant 0 : index
      %71 = vector.load %arg10[%c0_42, %c0_43] : memref<8x128xf32, #tpu.memory_space<vmem>>, vector<8x128xf32>
      tpu.vector_store %arg10[%c0_42, %c0_43], %70 {strides = array<i32>} : memref<8x128xf32, #tpu.memory_space<vmem>>, vector<8x128xf32>,
      %c0_44 = arith.constant 0 : index
      %c0_45 = arith.constant 0 : index
      %72 = vector.load %arg13[%c0_44, %c0_45] : memref<8x128xf32, #tpu.memory_space<vmem>>, vector<8x128xf32>
      %cst_46 = arith.constant dense<0.000000e+00> : vector<128xf32>
      %73 = vector.multi_reduction <add>, %72, %cst_46 [0] : vector<8x128xf32> to vector<128xf32>
      %74 = vector.shape_cast %73 : vector<128xf32> to vector<1x128xf32>
      %cst_47 = arith.constant 8.000000e+00 : f32
      %75 = vector.broadcast %cst_47 : f32 to vector<1x128xf32>
      %76 = arith.divf %74, %75 : vector<1x128xf32>
      %77 = vector.broadcast %76 : vector<1x128xf32> to vector<8x128xf32>
      %78 = arith.subf %72, %77 : vector<8x128xf32>
      %79 = arith.mulf %78, %78 : vector<8x128xf32>
      %cst_48 = arith.constant dense<0.000000e+00> : vector<128xf32>
      %80 = vector.multi_reduction <add>, %79, %cst_48 [0] : vector<8x128xf32> to vector<128xf32>
      %81 = vector.shape_cast %80 : vector<128xf32> to vector<1x128xf32>
      %cst_49 = arith.constant 8.000000e+00 : f32
      %82 = vector.broadcast %cst_49 : f32 to vector<1x128xf32>
      %83 = arith.divf %81, %82 : vector<1x128xf32>
      %84 = vector.broadcast %76 : vector<1x128xf32> to vector<8x128xf32>
      %85 = arith.subf %72, %84 : vector<8x128xf32>
      %cst_50 = arith.constant 9.99999974E-6 : f32
      %86 = vector.broadcast %cst_50 : f32 to vector<1x128xf32>
      %87 = arith.addf %83, %86 : vector<1x128xf32>
      %88 = math.rsqrt %87 : vector<1x128xf32>
      %89 = vector.broadcast %88 : vector<1x128xf32> to vector<8x128xf32>
      %90 = arith.mulf %85, %89 : vector<8x128xf32>
      %c0_51 = arith.constant 0 : index
      %c0_52 = arith.constant 0 : index
      %91 = vector.load %arg9[%c0_51, %c0_52] : memref<8x128xf32, #tpu.memory_space<vmem>>, vector<8x128xf32>
      tpu.vector_store %arg9[%c0_51, %c0_52], %90 {strides = array<i32>} : memref<8x128xf32, #tpu.memory_space<vmem>>, vector<8x128xf32>,
      %92 = arith.truncf %90 : vector<8x128xf32> to vector<8x128xbf16>
      %cst_53 = arith.constant dense<0.000000e+00> : vector<8x128xf32>
      %93 = tpu.matmul %92, %21, %cst_53 {dimension_numbers = #tpu.dot_dimension_numbers<[1], [0], [0], [1], [0, 0, 1, 1], [], []>} : vector<8x128xbf16>, vector<128x128xbf16>, vector<8x128xf32> -> vector<8x128xf32>
      %cst_54 = arith.constant dense<0.000000e+00> : vector<128xf32>
      %94 = vector.multi_reduction <add>, %93, %cst_54 [0] : vector<8x128xf32> to vector<128xf32>
      %95 = vector.shape_cast %94 : vector<128xf32> to vector<1x128xf32>
      %cst_55 = arith.constant 8.000000e+00 : f32
      %96 = vector.broadcast %cst_55 : f32 to vector<1x128xf32>
      %97 = arith.divf %95, %96 : vector<1x128xf32>
      %98 = vector.broadcast %97 : vector<1x128xf32> to vector<8x128xf32>
      %99 = arith.subf %93, %98 : vector<8x128xf32>
      %100 = arith.mulf %99, %99 : vector<8x128xf32>
      %cst_56 = arith.constant dense<0.000000e+00> : vector<128xf32>
      %101 = vector.multi_reduction <add>, %100, %cst_56 [0] : vector<8x128xf32> to vector<128xf32>
      %102 = vector.shape_cast %101 : vector<128xf32> to vector<1x128xf32>
      %cst_57 = arith.constant 8.000000e+00 : f32
      %103 = vector.broadcast %cst_57 : f32 to vector<1x128xf32>
      %104 = arith.divf %102, %103 : vector<1x128xf32>
      %105 = vector.broadcast %97 : vector<1x128xf32> to vector<8x128xf32>
      %106 = arith.subf %93, %105 : vector<8x128xf32>
      %cst_58 = arith.constant 9.99999974E-6 : f32
      %107 = vector.broadcast %cst_58 : f32 to vector<1x128xf32>
      %108 = arith.addf %104, %107 : vector<1x128xf32>
      %109 = math.rsqrt %108 : vector<1x128xf32>
      %110 = vector.broadcast %109 : vector<1x128xf32> to vector<8x128xf32>
      %111 = arith.mulf %106, %110 : vector<8x128xf32>
      %112 = vector.broadcast %19 : vector<1x128xf32> to vector<8x128xf32>
      %113 = arith.mulf %111, %112 : vector<8x128xf32>
      %114 = vector.broadcast %20 : vector<1x128xf32> to vector<8x128xf32>
      %115 = arith.addf %113, %114 : vector<8x128xf32>
      %cst_59 = arith.constant 0.000000e+00 : f32
      %116 = vector.broadcast %cst_59 : f32 to vector<8x128xf32>
      %117 = arith.maximumf %115, %116 : vector<8x128xf32>
      %118 = arith.truncf %117 : vector<8x128xf32> to vector<8x128xbf16>
      %cst_60 = arith.constant dense<0.000000e+00> : vector<8x128xf32>
      %119 = tpu.matmul %118, %22, %cst_60 {dimension_numbers = #tpu.dot_dimension_numbers<[1], [0], [0], [1], [0, 0, 1, 1], [], []>} : vector<8x128xbf16>, vector<128x128xbf16>, vector<8x128xf32> -> vector<8x128xf32>
      %c0_61 = arith.constant 0 : index
      %c0_62 = arith.constant 0 : index
      %120 = vector.load %arg11[%c0_61, %c0_62] : memref<8x128xf32, #tpu.memory_space<vmem>>, vector<8x128xf32>
      tpu.vector_store %arg11[%c0_61, %c0_62], %119 {strides = array<i32>} : memref<8x128xf32, #tpu.memory_space<vmem>>, vector<8x128xf32>,
    } else {
    }
    return
  }
  func.func @transform_0(%arg0: i32) -> (i32, i32) {
    %c0_i32 = arith.constant 0 : i32
    %c0_i32_0 = arith.constant 0 : i32
    return %c0_i32, %arg0 : i32, i32
  }
  func.func @transform_1(%arg0: i32) -> (i32, i32) {
    %c0_i32 = arith.constant 0 : i32
    %c0_i32_0 = arith.constant 0 : i32
    return %c0_i32, %arg0 : i32, i32
  }
  func.func @transform_2(%arg0: i32) -> (i32, i32) {
    %c0_i32 = arith.constant 0 : i32
    %c0_i32_0 = arith.constant 0 : i32
    return %arg0, %c0_i32 : i32, i32
  }
  func.func @transform_3(%arg0: i32) -> (i32, i32) {
    %c0_i32 = arith.constant 0 : i32
    %c0_i32_0 = arith.constant 0 : i32
    %c0_i32_1 = arith.constant 0 : i32
    return %c0_i32, %c0_i32_0 : i32, i32
  }
  func.func @transform_4(%arg0: i32) -> (i32, i32) {
    %c0_i32 = arith.constant 0 : i32
    %c0_i32_0 = arith.constant 0 : i32
    %c0_i32_1 = arith.constant 0 : i32
    return %c0_i32, %c0_i32_0 : i32, i32
  }
  func.func @transform_5(%arg0: i32) -> (i32, i32) {
    %c0_i32 = arith.constant 0 : i32
    %c0_i32_0 = arith.constant 0 : i32
    %c0_i32_1 = arith.constant 0 : i32
    return %c0_i32, %c0_i32_0 : i32, i32
  }
  func.func @transform_6(%arg0: i32) -> (i32, i32) {
    %c0_i32 = arith.constant 0 : i32
    %c0_i32_0 = arith.constant 0 : i32
    %c0_i32_1 = arith.constant 0 : i32
    return %c0_i32, %c0_i32_0 : i32, i32
  }
  func.func @transform_7(%arg0: i32) -> (i32, i32) {
    %c0_i32 = arith.constant 0 : i32
    %c0_i32_0 = arith.constant 0 : i32
    %c0_i32_1 = arith.constant 0 : i32
    return %c0_i32, %c0_i32_0 : i32, i32
  }
  func.func @transform_8(%arg0: i32) -> (i32, i32) {
    %c0_i32 = arith.constant 0 : i32
    %c0_i32_0 = arith.constant 0 : i32
    %c0_i32_1 = arith.constant 0 : i32
    return %c0_i32, %c0_i32_0 : i32, i32
  }
  func.func @transform_9(%arg0: i32) -> (i32, i32) {
    %c0_i32 = arith.constant 0 : i32
    %c0_i32_0 = arith.constant 0 : i32
    %c0_i32_1 = arith.constant 0 : i32
    return %c0_i32, %c0_i32_0 : i32, i32
  }
  func.func @transform_10(%arg0: i32) -> (i32, i32) {
    %c0_i32 = arith.constant 0 : i32
    %c0_i32_0 = arith.constant 0 : i32
    %c0_i32_1 = arith.constant 0 : i32
    return %c0_i32, %c0_i32_0 : i32, i32
  }
}

</mosaic_0001>

<llo_original>
// kernel: _lambda_.1
$region0: #{_lambda_.1}
  #allocation0 [shape = 'u32[]', space=smem, size = 0x4, offset = 0x4, fixed_abs, tag = 'smem constant byte address 0x4 - core index']
  #allocation1 [shape = 'u32[144,128]{1,0:T(1,128)}', space=vmem, size = 0x12000, scoped, tag = 'internal scratch']
  #allocation2 [shape = 'f32[8,128]{1,0:T(8,128)}', space=vmem, size = 0x1000, scoped, tag = 'scratch operand']
  #allocation3 [shape = 'f32[8,128]{1,0:T(8,128)}', space=vmem, size = 0x1000, scoped, tag = 'scratch operand']
  %s0 = inlined_call_operand.vmem [shape: f32[8,768], index: 0, kind: input, shape index: {}]
  %s1 = inlined_call_operand.vmem [shape: f32[8,768], index: 1, kind: input, shape index: {}]
  %s2 = inlined_call_operand.vmem [shape: bf16[768,128], index: 2, kind: input, shape index: {}]
  %s3 = inlined_call_operand.vmem [shape: bf16[128,128], index: 3, kind: input, shape index: {}]
  %s4 = inlined_call_operand.vmem [shape: f32[1,128], index: 4, kind: input, shape index: {}]
  %s5 = inlined_call_operand.vmem [shape: f32[1,128], index: 5, kind: input, shape index: {}]
  %s6 = inlined_call_operand.hbm [shape: bf16[128,128], index: 6, kind: input, shape index: {}]
  %s7 = inlined_call_operand.hbm [shape: f32[8,128], index: 7, kind: output, shape index: {0}]
  %s8 = inlined_call_operand.hbm [shape: f32[8,128], index: 8, kind: output, shape index: {1}]
  %s9 = inlined_call_operand.hbm [shape: f32[8,128], index: 9, kind: output, shape index: {2}]
  %s10 = inlined_call_operand.hbm [shape: f32[8,128], index: 10, kind: output, shape index: {3}]
  %11 = xla_tuple %s7, %s8, %s9, %s10
  %s12 = sld [smem:[#allocation0]]
  $region74: #{_lambda_.1} parent=0
    _
  %s14 = ssub.s32 1, %s12
  %s15 = scalar_select 0, %s14, %s12
  $region1: #{_lambda_.1} parent=0
    #allocation4 [shape = 'u8[32768]{0}', space=vmem, size = 0x8000, scoped, tag = 'input window, operand 6, single buffered']
    #allocation5 [shape = 's32[1]{0}', space=sflag, size = 0x4, scoped, tag = 'scoped memory for _lambda_.1']
    #allocation6 [shape = 's32[1]{0}', space=sflag, size = 0x4, scoped, tag = 'scoped memory for _lambda_.1']
    #allocation7 [shape = 'u8[4096]{0}', space=vmem, size = 0x1000, scoped, tag = 'output window, operand 0, single buffered']
    #allocation8 [shape = 'u8[4096]{0}', space=vmem, size = 0x1000, scoped, tag = 'output window, operand 1, single buffered']
    #allocation9 [shape = 's32[1]{0}', space=sflag, size = 0x4, scoped, tag = 'scoped memory for _lambda_.1']
    #allocation10 [shape = 'u8[4096]{0}', space=vmem, size = 0x1000, scoped, tag = 'output window, operand 2, single buffered']
    #allocation11 [shape = 'u8[4096]{0}', space=vmem, size = 0x1000, scoped, tag = 'output window, operand 3, single buffered']
    #allocation12 [shape = 's32[1]{0}', space=sflag, size = 0x4, scoped, tag = 'scoped memory for _lambda_.1']
    %16 = vsyncpa [#allocation5], 0
    %17 = vsyncpa [#allocation6], 0
    %18 = vsyncpa [#allocation9], 0
    %19 = vsyncpa [#allocation12], 0
    // Predicated region
    $region2: #{_lambda_.1} parent=1 // pred_check
      _
    $region3: #{_lambda_.1} parent=1 // pred_check_branch
      %21 = sbr.rel (0) target = $region5
    $region4: #{_lambda_.1} parent=1 // pred_region
      _
    $region5: #{_lambda_.1} parent=1 // pred_fallthru
      _
    // Predicated region
    $region6: #{_lambda_.1} parent=1 // pred_check
      _
    $region7: #{_lambda_.1} parent=1 // pred_check_branch
      %23 = sbr.rel (0) target = $region9
    $region8: #{_lambda_.1} parent=1 // pred_region
      _
    $region9: #{_lambda_.1} parent=1 // pred_fallthru
      _
    // Predicated region
    $region10: #{_lambda_.1} parent=1 // pred_check
      _
    $region11: #{_lambda_.1} parent=1 // pred_check_branch
      %25 = sbr.rel (0) target = $region13
    $region12: #{_lambda_.1} parent=1 // pred_region
      _
    $region13: #{_lambda_.1} parent=1 // pred_fallthru
      _
    // Predicated region
    $region14: #{_lambda_.1} parent=1 // pred_check
      _
    $region15: #{_lambda_.1} parent=1 // pred_check_branch
      %27 = sbr.rel (0) target = $region17
    $region16: #{_lambda_.1} parent=1 // pred_region
      _
    $region17: #{_lambda_.1} parent=1 // pred_fallthru
      _
    // Predicated region
    $region18: #{_lambda_.1} parent=1 // pred_check
      _
    $region19: #{_lambda_.1} parent=1 // pred_check_branch
      %29 = sbr.rel (0) target = $region21
    $region20: #{_lambda_.1} parent=1 // pred_region
      _
    $region21: #{_lambda_.1} parent=1 // pred_fallthru
      _
    // Predicated region
    $region22: #{_lambda_.1} parent=1 // pred_check
      _
    $region23: #{_lambda_.1} parent=1 // pred_check_branch
      %31 = sbr.rel (0) target = $region25
    $region24: #{_lambda_.1} parent=1 // pred_region
      _
    $region25: #{_lambda_.1} parent=1 // pred_fallthru
      _
    // Predicated region
    $region26: #{_lambda_.1} parent=1 // pred_check
      _
    $region27: #{_lambda_.1} parent=1 // pred_check_branch
      %33 = sbr.rel (0) target = $region29
    $region28: #{_lambda_.1} parent=1 // pred_region
      %s35 = ssub.s32 1024, 1024
      %36 = vsyncadd [#allocation5], %s35
      %s37 = sshll.u32 [#allocation4], 4
      %s38 = int_to_ptr.vmem [resolvable:$true] %s37
      %43 = dma.hbm_to_vmem [thread:$0]  %s6, 1024, %s38, [#allocation5], 64, 64, 4
    $region29: #{_lambda_.1} parent=1 // pred_fallthru
      _
    // Predicated region
    $region30: #{_lambda_.1} parent=1 // pred_check
      _
    $region31: #{_lambda_.1} parent=1 // pred_check_branch
      %45 = sbr.rel (0) target = $region33
    $region32: #{_lambda_.1} parent=1 // pred_region
      %46 = dma.done [#allocation5], 1024
    $region33: #{_lambda_.1} parent=1 // pred_fallthru
      _
    %p48 = scmp.eq.s32.totalorder 0, 0
    // Predicated region
    $region34: #{_lambda_.1} parent=1 // pred_check
      %p49 = pneg %p48
    $region35: #{_lambda_.1} parent=1 // pred_check_branch
      %51 = sbr.rel (%p49) target = $region37
    $region36: #{_lambda_.1} parent=1 // pred_region
      %52 = vst [vmem:[#allocation2] sm:$0xff] 0.0
      %53 = vst [vmem:[#allocation3] sm:$0xff] 0.0
    $region37: #{_lambda_.1} parent=1 // pred_fallthru
      _
    %v54 = vld [vmem:[%s2] sm:$0xf]
    %v55 = vld [vmem:[%s2 + $0x4] sm:$0xf]
    %v56 = vld [vmem:[%s2 + $0x8] sm:$0xf]
    %v57 = vld [vmem:[%s2 + $0xc] sm:$0xf]
    %v58 = vld [vmem:[%s2 + $0x10] sm:$0xf]
    %v59 = vld [vmem:[%s2 + $0x14] sm:$0xf]
    %v60 = vld [vmem:[%s2 + $0x18] sm:$0xf]
    %v61 = vld [vmem:[%s2 + $0x1c] sm:$0xf]
    %v62 = vld [vmem:[%s2 + $0x20] sm:$0xf]
    %v63 = vld [vmem:[%s2 + $0x24] sm:$0xf]
    %v64 = vld [vmem:[%s2 + $0x28] sm:$0xf]
    %v65 = vld [vmem:[%s2 + $0x2c] sm:$0xf]
    %v66 = vld [vmem:[%s2 + $0x30] sm:$0xf]
    %v67 = vld [vmem:[%s2 + $0x34] sm:$0xf]
    %v68 = vld [vmem:[%s2 + $0x38] sm:$0xf]
    %v69 = vld [vmem:[%s2 + $0x3c] sm:$0xf]
    %v70 = vld [vmem:[%s2 + $0x40] sm:$0xf]
    %v71 = vld [vmem:[%s2 + $0x44] sm:$0xf]
    %v72 = vld [vmem:[%s2 + $0x48] sm:$0xf]
    %v73 = vld [vmem:[%s2 + $0x4c] sm:$0xf]
    %v74 = vld [vmem:[%s2 + $0x50] sm:$0xf]
    %v75 = vld [vmem:[%s2 + $0x54] sm:$0xf]
    %v76 = vld [vmem:[%s2 + $0x58] sm:$0xf]
    %v77 = vld [vmem:[%s2 + $0x5c] sm:$0xf]
    %v78 = vld [vmem:[%s2 + $0x60] sm:$0xf]
    %v79 = vld [vmem:[%s2 + $0x64] sm:$0xf]
    %v80 = vld [vmem:[%s2 + $0x68] sm:$0xf]
    %v81 = vld [vmem:[%s2 + $0x6c] sm:$0xf]
    %v82 = vld [vmem:[%s2 + $0x70] sm:$0xf]
    %v83 = vld [vmem:[%s2 + $0x74] sm:$0xf]
    %v84 = vld [vmem:[%s2 + $0x78] sm:$0xf]
    %v85 = vld [vmem:[%s2 + $0x7c] sm:$0xf]
    %v86 = vld [vmem:[%s2 + $0x80] sm:$0xf]
    %v87 = vld [vmem:[%s2 + $0x84] sm:$0xf]
    %v88 = vld [vmem:[%s2 + $0x88] sm:$0xf]
    %v89 = vld [vmem:[%s2 + $0x8c] sm:$0xf]
    %v90 = vld [vmem:[%s2 + $0x90] sm:$0xf]
    %v91 = vld [vmem:[%s2 + $0x94] sm:$0xf]
    %v92 = vld [vmem:[%s2 + $0x98] sm:$0xf]
    %v93 = vld [vmem:[%s2 + $0x9c] sm:$0xf]
    %v94 = vld [vmem:[%s2 + $0xa0] sm:$0xf]
    %v95 = vld [vmem:[%s2 + $0xa4] sm:$0xf]
    %v96 = vld [vmem:[%s2 + $0xa8] sm:$0xf]
    %v97 = vld [vmem:[%s2 + $0xac] sm:$0xf]
    %v98 = vld [vmem:[%s2 + $0xb0] sm:$0xf]
    %v99 = vld [vmem:[%s2 + $0xb4] sm:$0xf]
    %v100 = vld [vmem:[%s2 + $0xb8] sm:$0xf]
    %v101 = vld [vmem:[%s2 + $0xbc] sm:$0xf]
    %v102 = vld [vmem:[%s2 + $0xc0] sm:$0xf]
    %v103 = vld [vmem:[%s2 + $0xc4] sm:$0xf]
    %v104 = vld [vmem:[%s2 + $0xc8] sm:$0xf]
    %v105 = vld [vmem:[%s2 + $0xcc] sm:$0xf]
    %v106 = vld [vmem:[%s2 + $0xd0] sm:$0xf]
    %v107 = vld [vmem:[%s2 + $0xd4] sm:$0xf]
    %v108 = vld [vmem:[%s2 + $0xd8] sm:$0xf]
    %v109 = vld [vmem:[%s2 + $0xdc] sm:$0xf]
    %v110 = vld [vmem:[%s2 + $0xe0] sm:$0xf]
    %v111 = vld [vmem:[%s2 + $0xe4] sm:$0xf]
    %v112 = vld [vmem:[%s2 + $0xe8] sm:$0xf]
    %v113 = vld [vmem:[%s2 + $0xec] sm:$0xf]
    %v114 = vld [vmem:[%s2 + $0xf0] sm:$0xf]
    %v115 = vld [vmem:[%s2 + $0xf4] sm:$0xf]
    %v116 = vld [vmem:[%s2 + $0xf8] sm:$0xf]
    %v117 = vld [vmem:[%s2 + $0xfc] sm:$0xf]
    %v118 = vld [vmem:[%s2 + $0x100] sm:$0xf]
    %v119 = vld [vmem:[%s2 + $0x104] sm:$0xf]
    %v120 = vld [vmem:[%s2 + $0x108] sm:$0xf]
    %v121 = vld [vmem:[%s2 + $0x10c] sm:$0xf]
    %v122 = vld [vmem:[%s2 + $0x110] sm:$0xf]
    %v123 = vld [vmem:[%s2 + $0x114] sm:$0xf]
    %v124 = vld [vmem:[%s2 + $0x118] sm:$0xf]
    %v125 = vld [vmem:[%s2 + $0x11c] sm:$0xf]
    %v126 = vld [vmem:[%s2 + $0x120] sm:$0xf]
    %v127 = vld [vmem:[%s2 + $0x124] sm:$0xf]
    %v128 = vld [vmem:[%s2 + $0x128] sm:$0xf]
    %v129 = vld [vmem:[%s2 + $0x12c] sm:$0xf]
    %v130 = vld [vmem:[%s2 + $0x130] sm:$0xf]
    %v131 = vld [vmem:[%s2 + $0x134] sm:$0xf]
    %v132 = vld [vmem:[%s2 + $0x138] sm:$0xf]
    %v133 = vld [vmem:[%s2 + $0x13c] sm:$0xf]
    %v134 = vld [vmem:[%s2 + $0x140] sm:$0xf]
    %v135 = vld [vmem:[%s2 + $0x144] sm:$0xf]
    %v136 = vld [vmem:[%s2 + $0x148] sm:$0xf]
    %v137 = vld [vmem:[%s2 + $0x14c] sm:$0xf]
    %v138 = vld [vmem:[%s2 + $0x150] sm:$0xf]
    %v139 = vld [vmem:[%s2 + $0x154] sm:$0xf]
    %v140 = vld [vmem:[%s2 + $0x158] sm:$0xf]
    %v141 = vld [vmem:[%s2 + $0x15c] sm:$0xf]
    %v142 = vld [vmem:[%s2 + $0x160] sm:$0xf]
    %v143 = vld [vmem:[%s2 + $0x164] sm:$0xf]
    %v144 = vld [vmem:[%s2 + $0x168] sm:$0xf]
    %v145 = vld [vmem:[%s2 + $0x16c] sm:$0xf]
    %v146 = vld [vmem:[%s2 + $0x170] sm:$0xf]
    %v147 = vld [vmem:[%s2 + $0x174] sm:$0xf]
    %v148 = vld [vmem:[%s2 + $0x178] sm:$0xf]
    %v149 = vld [vmem:[%s2 + $0x17c] sm:$0xf]
    %v150 = vld [vmem:[#allocation2] sm:$0xff]
    %v151 = vld [vmem:[%s0] sm:$0xff]
    %v152 = vld [vmem:[%s0 + $0x8] sm:$0xff]
    %v153 = vld [vmem:[%s0 + $0x10] sm:$0xff]
    %v154 = vld [vmem:[%s0 + $0x18] sm:$0xff]
    %v155 = vld [vmem:[%s0 + $0x20] sm:$0xff]
    %v156 = vld [vmem:[%s0 + $0x28] sm:$0xff]
    %v157 = vpack.c.bf16 %v151, %v151
    %v158 = vpack.c.bf16 %v152, %v152
    %v159 = vpack.c.bf16 %v153, %v153
    %v160 = vpack.c.bf16 %v154, %v154
    %v161 = vpack.c.bf16 %v155, %v155
    %v162 = vpack.c.bf16 %v156, %v156
    %v259 = vunpack.c.l.b16 %v54
    %v260 = vunpack.c.l.b16 %v55
    %v261 = vunpack.c.l.b16 %v56
    %v262 = vunpack.c.l.b16 %v57
    %v263 = vunpack.c.l.b16 %v58
    %v264 = vunpack.c.l.b16 %v59
    %v265 = vunpack.c.l.b16 %v60
    %v266 = vunpack.c.l.b16 %v61
    %v267 = vunpack.c.l.b16 %v62
    %v268 = vunpack.c.l.b16 %v63
    %v269 = vunpack.c.l.b16 %v64
    %v270 = vunpack.c.l.b16 %v65
    %v271 = vunpack.c.l.b16 %v66
    %v272 = vunpack.c.l.b16 %v67
    %v273 = vunpack.c.l.b16 %v68
    %v274 = vunpack.c.l.b16 %v69
    %v275 = vunpack.c.l.b16 %v70
    %v276 = vunpack.c.l.b16 %v71
    %v277 = vunpack.c.l.b16 %v72
    %v278 = vunpack.c.l.b16 %v73
    %v279 = vunpack.c.l.b16 %v74
    %v280 = vunpack.c.l.b16 %v75
    %v281 = vunpack.c.l.b16 %v76
    %v282 = vunpack.c.l.b16 %v77
    %v283 = vunpack.c.l.b16 %v78
    %v284 = vunpack.c.l.b16 %v79
    %v285 = vunpack.c.l.b16 %v80
    %v286 = vunpack.c.l.b16 %v81
    %v287 = vunpack.c.l.b16 %v82
    %v288 = vunpack.c.l.b16 %v83
    %v289 = vunpack.c.l.b16 %v84
    %v290 = vunpack.c.l.b16 %v85
    %v291 = vunpack.c.l.b16 %v86
    %v292 = vunpack.c.l.b16 %v87
    %v293 = vunpack.c.l.b16 %v88
    %v294 = vunpack.c.l.b16 %v89
    %v295 = vunpack.c.l.b16 %v90
    %v296 = vunpack.c.l.b16 %v91
    %v297 = vunpack.c.l.b16 %v92
    %v298 = vunpack.c.l.b16 %v93
    %v299 = vunpack.c.l.b16 %v94
    %v300 = vunpack.c.l.b16 %v95
    %v301 = vunpack.c.l.b16 %v96
    %v302 = vunpack.c.l.b16 %v97
    %v303 = vunpack.c.l.b16 %v98
    %v304 = vunpack.c.l.b16 %v99
    %v305 = vunpack.c.l.b16 %v100
    %v306 = vunpack.c.l.b16 %v101
    %v307 = vunpack.c.l.b16 %v102
    %v308 = vunpack.c.l.b16 %v103
    %v309 = vunpack.c.l.b16 %v104
    %v310 = vunpack.c.l.b16 %v105
    %v311 = vunpack.c.l.b16 %v106
    %v312 = vunpack.c.l.b16 %v107
    %v313 = vunpack.c.l.b16 %v108
    %v314 = vunpack.c.l.b16 %v109
    %v315 = vunpack.c.l.b16 %v110
    %v316 = vunpack.c.l.b16 %v111
    %v317 = vunpack.c.l.b16 %v112
    %v318 = vunpack.c.l.b16 %v113
    %v319 = vunpack.c.l.b16 %v114
    %v320 = vunpack.c.l.b16 %v115
    %v321 = vunpack.c.l.b16 %v116
    %v322 = vunpack.c.l.b16 %v117
    %v323 = vunpack.c.l.b16 %v118
    %v324 = vunpack.c.l.b16 %v119
    %v325 = vunpack.c.l.b16 %v120
    %v326 = vunpack.c.l.b16 %v121
    %v327 = vunpack.c.l.b16 %v122
    %v328 = vunpack.c.l.b16 %v123
    %v329 = vunpack.c.l.b16 %v124
    %v330 = vunpack.c.l.b16 %v125
    %v331 = vunpack.c.l.b16 %v126
    %v332 = vunpack.c.l.b16 %v127
    %v333 = vunpack.c.l.b16 %v128
    %v334 = vunpack.c.l.b16 %v129
    %v335 = vunpack.c.l.b16 %v130
    %v336 = vunpack.c.l.b16 %v131
    %v337 = vunpack.c.l.b16 %v132
    %v338 = vunpack.c.l.b16 %v133
    %v339 = vunpack.c.l.b16 %v134
    %v340 = vunpack.c.l.b16 %v135
    %v341 = vunpack.c.l.b16 %v136
    %v342 = vunpack.c.l.b16 %v137
    %v343 = vunpack.c.l.b16 %v138
    %v344 = vunpack.c.l.b16 %v139
    %v345 = vunpack.c.l.b16 %v140
    %v346 = vunpack.c.l.b16 %v141
    %v347 = vunpack.c.l.b16 %v142
    %v348 = vunpack.c.l.b16 %v143
    %v349 = vunpack.c.l.b16 %v144
    %v350 = vunpack.c.l.b16 %v145
    %v351 = vunpack.c.l.b16 %v146
    %v352 = vunpack.c.l.b16 %v147
    %v353 = vunpack.c.l.b16 %v148
    %v354 = vunpack.c.l.b16 %v149
    %v355 = vpack.c.b16 %v260, %v259
    %v356 = vpack.c.b16 %v262, %v261
    %v357 = vpack.c.b16 %v264, %v263
    %v358 = vpack.c.b16 %v266, %v265
    %v359 = vpack.c.b16 %v268, %v267
    %v360 = vpack.c.b16 %v270, %v269
    %v361 = vpack.c.b16 %v272, %v271
    %v362 = vpack.c.b16 %v274, %v273
    %v363 = vpack.c.b16 %v276, %v275
    %v364 = vpack.c.b16 %v278, %v277
    %v365 = vpack.c.b16 %v280, %v279
    %v366 = vpack.c.b16 %v282, %v281
    %v367 = vpack.c.b16 %v284, %v283
    %v368 = vpack.c.b16 %v286, %v285
    %v369 = vpack.c.b16 %v288, %v287
    %v370 = vpack.c.b16 %v290, %v289
    %v371 = vpack.c.b16 %v292, %v291
    %v372 = vpack.c.b16 %v294, %v293
    %v373 = vpack.c.b16 %v296, %v295
    %v374 = vpack.c.b16 %v298, %v297
    %v375 = vpack.c.b16 %v300, %v299
    %v376 = vpack.c.b16 %v302, %v301
    %v377 = vpack.c.b16 %v304, %v303
    %v378 = vpack.c.b16 %v306, %v305
    %v379 = vpack.c.b16 %v308, %v307
    %v380 = vpack.c.b16 %v310, %v309
    %v381 = vpack.c.b16 %v312, %v311
    %v382 = vpack.c.b16 %v314, %v313
    %v383 = vpack.c.b16 %v316, %v315
    %v384 = vpack.c.b16 %v318, %v317
    %v385 = vpack.c.b16 %v320, %v319
    %v386 = vpack.c.b16 %v322, %v321
    %v387 = vpack.c.b16 %v324, %v323
    %v388 = vpack.c.b16 %v326, %v325
    %v389 = vpack.c.b16 %v328, %v327
    %v390 = vpack.c.b16 %v330, %v329
    %v391 = vpack.c.b16 %v332, %v331
    %v392 = vpack.c.b16 %v334, %v333
    %v393 = vpack.c.b16 %v336, %v335
    %v394 = vpack.c.b16 %v338, %v337
    %v395 = vpack.c.b16 %v340, %v339
    %v396 = vpack.c.b16 %v342, %v341
    %v397 = vpack.c.b16 %v344, %v343
    %v398 = vpack.c.b16 %v346, %v345
    %v399 = vpack.c.b16 %v348, %v347
    %v400 = vpack.c.b16 %v350, %v349
    %v401 = vpack.c.b16 %v352, %v351
    %v402 = vpack.c.b16 %v354, %v353
    %451 = vmatprep.subr.bf16.mxu0 0
    %452 = vmatpush1.bf16.msra.mxu0 %v355
    %453 = vmatprep.subr.bf16.mxu0 0
    %454 = vmatpush1.bf16.msra.mxu0 %v356
    %455 = vmatprep.subr.bf16.mxu0 0
    %456 = vmatpush1.bf16.msra.mxu0 %v357
    %457 = vmatprep.subr.bf16.mxu0 0
    %458 = vmatpush1.bf16.msra.mxu0 %v358
    %459 = vmatprep.subr.bf16.mxu0 0
    %460 = vmatpush1.bf16.msra.mxu0 %v359
    %461 = vmatprep.subr.bf16.mxu0 0
    %462 = vmatpush1.bf16.msra.mxu0 %v360
    %463 = vmatprep.subr.bf16.mxu0 0
    %464 = vmatpush1.bf16.msra.mxu0 %v361
    %465 = vmatprep.subr.bf16.mxu0 0
    %466 = vmatpush1.bf16.msra.mxu0 %v362
    %467 = vmatprep.subr.bf16.mxu0 0
    %468 = vmatpush1.bf16.msra.mxu0 %v363
    %469 = vmatprep.subr.bf16.mxu0 0
    %470 = vmatpush1.bf16.msra.mxu0 %v364
    %471 = vmatprep.subr.bf16.mxu0 0
    %472 = vmatpush1.bf16.msra.mxu0 %v365
    %473 = vmatprep.subr.bf16.mxu0 0
    %474 = vmatpush1.bf16.msra.mxu0 %v366
    %475 = vmatprep.subr.bf16.mxu0 0
    %476 = vmatpush1.bf16.msra.mxu0 %v367
    %477 = vmatprep.subr.bf16.mxu0 0
    %478 = vmatpush1.bf16.msra.mxu0 %v368
    %479 = vmatprep.subr.bf16.mxu0 0
    %480 = vmatpush1.bf16.msra.mxu0 %v369
    %481 = vmatprep.subr.bf16.mxu0 0
    %482 = vmatpush1.bf16.msra.mxu0 %v370
    %483 = vmatprep.mubr.bf16.mxu0 %v158
    %484 = vmatmul.mubr.bf16.gmra.mrb[0].mxu0 %v157
    %v485 = vpop.f32.mrb[0].mxu0
    %v486 = vadd.f32 0.0, %v485
    %v487 = vpop.f32.mrb[0].mxu0
    %v488 = vpop.f32.mrb[0].mxu0
    %v489 = vpop.f32.mrb[0].mxu0
    %490 = vdwg.mxu0
    %491 = vmatprep.subr.bf16.mxu0 0
    %492 = vmatpush1.bf16.msra.mxu0 %v371
    %493 = vmatprep.subr.bf16.mxu0 0
    %494 = vmatpush1.bf16.msra.mxu0 %v372
    %495 = vmatprep.subr.bf16.mxu0 0
    %496 = vmatpush1.bf16.msra.mxu0 %v373
    %497 = vmatprep.subr.bf16.mxu0 0
    %498 = vmatpush1.bf16.msra.mxu0 %v374
    %499 = vmatprep.subr.bf16.mxu0 0
    %500 = vmatpush1.bf16.msra.mxu0 %v375
    %501 = vmatprep.subr.bf16.mxu0 0
    %502 = vmatpush1.bf16.msra.mxu0 %v376
    %503 = vmatprep.subr.bf16.mxu0 0
    %504 = vmatpush1.bf16.msra.mxu0 %v377
    %505 = vmatprep.subr.bf16.mxu0 0
    %506 = vmatpush1.bf16.msra.mxu0 %v378
    %507 = vmatprep.subr.bf16.mxu0 0
    %508 = vmatpush1.bf16.msra.mxu0 %v379
    %509 = vmatprep.subr.bf16.mxu0 0
    %510 = vmatpush1.bf16.msra.mxu0 %v380
    %511 = vmatprep.subr.bf16.mxu0 0
    %512 = vmatpush1.bf16.msra.mxu0 %v381
    %513 = vmatprep.subr.bf16.mxu0 0
    %514 = vmatpush1.bf16.msra.mxu0 %v382
    %515 = vmatprep.subr.bf16.mxu0 0
    %516 = vmatpush1.bf16.msra.mxu0 %v383
    %517 = vmatprep.subr.bf16.mxu0 0
    %518 = vmatpush1.bf16.msra.mxu0 %v384
    %519 = vmatprep.subr.bf16.mxu0 0
    %520 = vmatpush1.bf16.msra.mxu0 %v385
    %521 = vmatprep.subr.bf16.mxu0 0
    %522 = vmatpush1.bf16.msra.mxu0 %v386
    %523 = vmatprep.mubr.bf16.mxu0 %v160
    %524 = vmatmul.mubr.bf16.gmra.mrb[0].mxu0 %v159
    %v525 = vpop.f32.mrb[0].mxu0
    %v526 = vadd.f32 %v486, %v525
    %v527 = vpop.f32.mrb[0].mxu0
    %v528 = vpop.f32.mrb[0].mxu0
    %v529 = vpop.f32.mrb[0].mxu0
    %530 = vdwg.mxu0
    %531 = vmatprep.subr.bf16.mxu0 0
    %532 = vmatpush1.bf16.msra.mxu0 %v387
    %533 = vmatprep.subr.bf16.mxu0 0
    %534 = vmatpush1.bf16.msra.mxu0 %v388
    %535 = vmatprep.subr.bf16.mxu0 0
    %536 = vmatpush1.bf16.msra.mxu0 %v389
    %537 = vmatprep.subr.bf16.mxu0 0
    %538 = vmatpush1.bf16.msra.mxu0 %v390
    %539 = vmatprep.subr.bf16.mxu0 0
    %540 = vmatpush1.bf16.msra.mxu0 %v391
    %541 = vmatprep.subr.bf16.mxu0 0
    %542 = vmatpush1.bf16.msra.mxu0 %v392
    %543 = vmatprep.subr.bf16.mxu0 0
    %544 = vmatpush1.bf16.msra.mxu0 %v393
    %545 = vmatprep.subr.bf16.mxu0 0
    %546 = vmatpush1.bf16.msra.mxu0 %v394
    %547 = vmatprep.subr.bf16.mxu0 0
    %548 = vmatpush1.bf16.msra.mxu0 %v395
    %549 = vmatprep.subr.bf16.mxu0 0
    %550 = vmatpush1.bf16.msra.mxu0 %v396
    %551 = vmatprep.subr.bf16.mxu0 0
    %552 = vmatpush1.bf16.msra.mxu0 %v397
    %553 = vmatprep.subr.bf16.mxu0 0
    %554 = vmatpush1.bf16.msra.mxu0 %v398
    %555 = vmatprep.subr.bf16.mxu0 0
    %556 = vmatpush1.bf16.msra.mxu0 %v399
    %557 = vmatprep.subr.bf16.mxu0 0
    %558 = vmatpush1.bf16.msra.mxu0 %v400
    %559 = vmatprep.subr.bf16.mxu0 0
    %560 = vmatpush1.bf16.msra.mxu0 %v401
    %561 = vmatprep.subr.bf16.mxu0 0
    %562 = vmatpush1.bf16.msra.mxu0 %v402
    %563 = vmatprep.mubr.bf16.mxu0 %v162
    %564 = vmatmul.mubr.bf16.gmra.mrb[0].mxu0 %v161
    %v565 = vpop.f32.mrb[0].mxu0
    %v566 = vadd.f32 %v526, %v565
    %v567 = vpop.f32.mrb[0].mxu0
    %v568 = vpop.f32.mrb[0].mxu0
    %v569 = vpop.f32.mrb[0].mxu0
    %570 = vdwg.mxu0
    %v571 = vadd.f32 %v150, %v566
    %572 = vst [vmem:[#allocation2] sm:$0xff] %v571
    %v573 = vld [vmem:[#allocation3] sm:$0xff]
    %v574 = vld [vmem:[%s1] sm:$0xff]
    %v575 = vld [vmem:[%s1 + $0x8] sm:$0xff]
    %v576 = vld [vmem:[%s1 + $0x10] sm:$0xff]
    %v577 = vld [vmem:[%s1 + $0x18] sm:$0xff]
    %v578 = vld [vmem:[%s1 + $0x20] sm:$0xff]
    %v579 = vld [vmem:[%s1 + $0x28] sm:$0xff]
    %v580 = vpack.c.bf16 %v574, %v574
    %v581 = vpack.c.bf16 %v575, %v575
    %v582 = vpack.c.bf16 %v576, %v576
    %v583 = vpack.c.bf16 %v577, %v577
    %v584 = vpack.c.bf16 %v578, %v578
    %v585 = vpack.c.bf16 %v579, %v579
    %586 = vmatprep.subr.bf16.mxu0 0
    %587 = vmatpush1.bf16.msra.mxu0 %v355
    %588 = vmatprep.subr.bf16.mxu0 0
    %589 = vmatpush1.bf16.msra.mxu0 %v356
    %590 = vmatprep.subr.bf16.mxu0 0
    %591 = vmatpush1.bf16.msra.mxu0 %v357
    %592 = vmatprep.subr.bf16.mxu0 0
    %593 = vmatpush1.bf16.msra.mxu0 %v358
    %594 = vmatprep.subr.bf16.mxu0 0
    %595 = vmatpush1.bf16.msra.mxu0 %v359
    %596 = vmatprep.subr.bf16.mxu0 0
    %597 = vmatpush1.bf16.msra.mxu0 %v360
    %598 = vmatprep.subr.bf16.mxu0 0
    %599 = vmatpush1.bf16.msra.mxu0 %v361
    %600 = vmatprep.subr.bf16.mxu0 0
    %601 = vmatpush1.bf16.msra.mxu0 %v362
    %602 = vmatprep.subr.bf16.mxu0 0
    %603 = vmatpush1.bf16.msra.mxu0 %v363
    %604 = vmatprep.subr.bf16.mxu0 0
    %605 = vmatpush1.bf16.msra.mxu0 %v364
    %606 = vmatprep.subr.bf16.mxu0 0
    %607 = vmatpush1.bf16.msra.mxu0 %v365
    %608 = vmatprep.subr.bf16.mxu0 0
    %609 = vmatpush1.bf16.msra.mxu0 %v366
    %610 = vmatprep.subr.bf16.mxu0 0
    %611 = vmatpush1.bf16.msra.mxu0 %v367
    %612 = vmatprep.subr.bf16.mxu0 0
    %613 = vmatpush1.bf16.msra.mxu0 %v368
    %614 = vmatprep.subr.bf16.mxu0 0
    %615 = vmatpush1.bf16.msra.mxu0 %v369
    %616 = vmatprep.subr.bf16.mxu0 0
    %617 = vmatpush1.bf16.msra.mxu0 %v370
    %618 = vmatprep.mubr.bf16.mxu0 %v581
    %619 = vmatmul.mubr.bf16.gmra.mrb[0].mxu0 %v580
    %v620 = vpop.f32.mrb[0].mxu0
    %v621 = vadd.f32 0.0, %v620
    %v622 = vpop.f32.mrb[0].mxu0
    %v623 = vpop.f32.mrb[0].mxu0
    %v624 = vpop.f32.mrb[0].mxu0
    %625 = vdwg.mxu0
    %626 = vmatprep.subr.bf16.mxu0 0
    %627 = vmatpush1.bf16.msra.mxu0 %v371
    %628 = vmatprep.subr.bf16.mxu0 0
    %629 = vmatpush1.bf16.msra.mxu0 %v372
    %630 = vmatprep.subr.bf16.mxu0 0
    %631 = vmatpush1.bf16.msra.mxu0 %v373
    %632 = vmatprep.subr.bf16.mxu0 0
    %633 = vmatpush1.bf16.msra.mxu0 %v374
    %634 = vmatprep.subr.bf16.mxu0 0
    %635 = vmatpush1.bf16.msra.mxu0 %v375
    %636 = vmatprep.subr.bf16.mxu0 0
    %637 = vmatpush1.bf16.msra.mxu0 %v376
    %638 = vmatprep.subr.bf16.mxu0 0
    %639 = vmatpush1.bf16.msra.mxu0 %v377
    %640 = vmatprep.subr.bf16.mxu0 0
    %641 = vmatpush1.bf16.msra.mxu0 %v378
    %642 = vmatprep.subr.bf16.mxu0 0
    %643 = vmatpush1.bf16.msra.mxu0 %v379
    %644 = vmatprep.subr.bf16.mxu0 0
    %645 = vmatpush1.bf16.msra.mxu0 %v380
    %646 = vmatprep.subr.bf16.mxu0 0
    %647 = vmatpush1.bf16.msra.mxu0 %v381
    %648 = vmatprep.subr.bf16.mxu0 0
    %649 = vmatpush1.bf16.msra.mxu0 %v382
    %650 = vmatprep.subr.bf16.mxu0 0
    %651 = vmatpush1.bf16.msra.mxu0 %v383
    %652 = vmatprep.subr.bf16.mxu0 0
    %653 = vmatpush1.bf16.msra.mxu0 %v384
    %654 = vmatprep.subr.bf16.mxu0 0
    %655 = vmatpush1.bf16.msra.mxu0 %v385
    %656 = vmatprep.subr.bf16.mxu0 0
    %657 = vmatpush1.bf16.msra.mxu0 %v386
    %658 = vmatprep.mubr.bf16.mxu0 %v583
    %659 = vmatmul.mubr.bf16.gmra.mrb[0].mxu0 %v582
    %v660 = vpop.f32.mrb[0].mxu0
    %v661 = vadd.f32 %v621, %v660
    %v662 = vpop.f32.mrb[0].mxu0
    %v663 = vpop.f32.mrb[0].mxu0
    %v664 = vpop.f32.mrb[0].mxu0
    %665 = vdwg.mxu0
    %666 = vmatprep.subr.bf16.mxu0 0
    %667 = vmatpush1.bf16.msra.mxu0 %v387
    %668 = vmatprep.subr.bf16.mxu0 0
    %669 = vmatpush1.bf16.msra.mxu0 %v388
    %670 = vmatprep.subr.bf16.mxu0 0
    %671 = vmatpush1.bf16.msra.mxu0 %v389
    %672 = vmatprep.subr.bf16.mxu0 0
    %673 = vmatpush1.bf16.msra.mxu0 %v390
    %674 = vmatprep.subr.bf16.mxu0 0
    %675 = vmatpush1.bf16.msra.mxu0 %v391
    %676 = vmatprep.subr.bf16.mxu0 0
    %677 = vmatpush1.bf16.msra.mxu0 %v392
    %678 = vmatprep.subr.bf16.mxu0 0
    %679 = vmatpush1.bf16.msra.mxu0 %v393
    %680 = vmatprep.subr.bf16.mxu0 0
    %681 = vmatpush1.bf16.msra.mxu0 %v394
    %682 = vmatprep.subr.bf16.mxu0 0
    %683 = vmatpush1.bf16.msra.mxu0 %v395
    %684 = vmatprep.subr.bf16.mxu0 0
    %685 = vmatpush1.bf16.msra.mxu0 %v396
    %686 = vmatprep.subr.bf16.mxu0 0
    %687 = vmatpush1.bf16.msra.mxu0 %v397
    %688 = vmatprep.subr.bf16.mxu0 0
    %689 = vmatpush1.bf16.msra.mxu0 %v398
    %690 = vmatprep.subr.bf16.mxu0 0
    %691 = vmatpush1.bf16.msra.mxu0 %v399
    %692 = vmatprep.subr.bf16.mxu0 0
    %693 = vmatpush1.bf16.msra.mxu0 %v400
    %694 = vmatprep.subr.bf16.mxu0 0
    %695 = vmatpush1.bf16.msra.mxu0 %v401
    %696 = vmatprep.subr.bf16.mxu0 0
    %697 = vmatpush1.bf16.msra.mxu0 %v402
    %698 = vmatprep.mubr.bf16.mxu0 %v585
    %699 = vmatmul.mubr.bf16.gmra.mrb[0].mxu0 %v584
    %v700 = vpop.f32.mrb[0].mxu0
    %v701 = vadd.f32 %v661, %v700
    %v702 = vpop.f32.mrb[0].mxu0
    %v703 = vpop.f32.mrb[0].mxu0
    %v704 = vpop.f32.mrb[0].mxu0
    %705 = vdwg.mxu0
    %v706 = vadd.f32 %v573, %v701
    %707 = vst [vmem:[#allocation3] sm:$0xff] %v706
    // Predicated region
    $region38: #{_lambda_.1} parent=1 // pred_check
      %p708 = pneg %p48
    $region39: #{_lambda_.1} parent=1 // pred_check_branch
      %710 = sbr.rel (%p708) target = $region41
    $region40: #{_lambda_.1} parent=1 // pred_region
      %v711 = vld [vmem:[%s4] sm:$0x1]
      %v712 = vld [vmem:[%s5] sm:$0x1]
      %v713 = vld [vmem:[%s3] sm:$0xf]
      %v714 = vld [vmem:[%s3 + $0x4] sm:$0xf]
      %v715 = vld [vmem:[%s3 + $0x8] sm:$0xf]
      %v716 = vld [vmem:[%s3 + $0xc] sm:$0xf]
      %v717 = vld [vmem:[%s3 + $0x10] sm:$0xf]
      %v718 = vld [vmem:[%s3 + $0x14] sm:$0xf]
      %v719 = vld [vmem:[%s3 + $0x18] sm:$0xf]
      %v720 = vld [vmem:[%s3 + $0x1c] sm:$0xf]
      %v721 = vld [vmem:[%s3 + $0x20] sm:$0xf]
      %v722 = vld [vmem:[%s3 + $0x24] sm:$0xf]
      %v723 = vld [vmem:[%s3 + $0x28] sm:$0xf]
      %v724 = vld [vmem:[%s3 + $0x2c] sm:$0xf]
      %v725 = vld [vmem:[%s3 + $0x30] sm:$0xf]
      %v726 = vld [vmem:[%s3 + $0x34] sm:$0xf]
      %v727 = vld [vmem:[%s3 + $0x38] sm:$0xf]
      %v728 = vld [vmem:[%s3 + $0x3c] sm:$0xf]
      %v729 = vld [vmem:[#allocation4] sm:$0xf]
      %v730 = vld [vmem:[#allocation4 + $0x4] sm:$0xf]
      %v731 = vld [vmem:[#allocation4 + $0x8] sm:$0xf]
      %v732 = vld [vmem:[#allocation4 + $0xc] sm:$0xf]
      %v733 = vld [vmem:[#allocation4 + $0x10] sm:$0xf]
      %v734 = vld [vmem:[#allocation4 + $0x14] sm:$0xf]
      %v735 = vld [vmem:[#allocation4 + $0x18] sm:$0xf]
      %v736 = vld [vmem:[#allocation4 + $0x1c] sm:$0xf]
      %v737 = vld [vmem:[#allocation4 + $0x20] sm:$0xf]
      %v738 = vld [vmem:[#allocation4 + $0x24] sm:$0xf]
      %v739 = vld [vmem:[#allocation4 + $0x28] sm:$0xf]
      %v740 = vld [vmem:[#allocation4 + $0x2c] sm:$0xf]
      %v741 = vld [vmem:[#allocation4 + $0x30] sm:$0xf]
      %v742 = vld [vmem:[#allocation4 + $0x34] sm:$0xf]
      %v743 = vld [vmem:[#allocation4 + $0x38] sm:$0xf]
      %v744 = vld [vmem:[#allocation4 + $0x3c] sm:$0xf]
      %v745 = vld [vmem:[#allocation2] sm:$0xff]
      %v746 = vrot.slane %v745, 4
      %v747 = vadd.f32 %v745, %v746
      %v748 = vrot.slane %v747, 2
      %v749 = vadd.f32 %v747, %v748
      %v750 = vrot.slane %v749, 1
      %v751 = vadd.f32 %v749, %v750
      %v752 = vrcp.pop 8.0
      %v753 = vmul.f32 %v751, %v752
      %v754 = vsub.f32 %v745, %v753
      %v755 = vmul.f32 %v754, %v754
      %v756 = vrot.slane %v755, 4
      %v757 = vadd.f32 %v755, %v756
      %v758 = vrot.slane %v757, 2
      %v759 = vadd.f32 %v757, %v758
      %v760 = vrot.slane %v759, 1
      %v761 = vadd.f32 %v759, %v760
      %v762 = vmul.f32 %v761, %v752
      %v763 = vadd.f32 %v762, 1e-05
      %v764 = vrsqrt.pop %v763
      %v765 = vmul.f32 %v754, %v764
      %766 = vst [vmem:[#allocation7] sm:$0xff] %v765
      %v767 = vpack.c.bf16 %v765, %v765
      %v784 = vunpack.c.l.b16 %v713
      %v785 = vunpack.c.l.b16 %v714
      %v786 = vunpack.c.l.b16 %v715
      %v787 = vunpack.c.l.b16 %v716
      %v788 = vunpack.c.l.b16 %v717
      %v789 = vunpack.c.l.b16 %v718
      %v790 = vunpack.c.l.b16 %v719
      %v791 = vunpack.c.l.b16 %v720
      %v792 = vunpack.c.l.b16 %v721
      %v793 = vunpack.c.l.b16 %v722
      %v794 = vunpack.c.l.b16 %v723
      %v795 = vunpack.c.l.b16 %v724
      %v796 = vunpack.c.l.b16 %v725
      %v797 = vunpack.c.l.b16 %v726
      %v798 = vunpack.c.l.b16 %v727
      %v799 = vunpack.c.l.b16 %v728
      %v800 = vpack.c.b16 %v785, %v784
      %v801 = vpack.c.b16 %v787, %v786
      %v802 = vpack.c.b16 %v789, %v788
      %v803 = vpack.c.b16 %v791, %v790
      %v804 = vpack.c.b16 %v793, %v792
      %v805 = vpack.c.b16 %v795, %v794
      %v806 = vpack.c.b16 %v797, %v796
      %v807 = vpack.c.b16 %v799, %v798
      %816 = vmatprep.subr.bf16.mxu0 0
      %817 = vmatpush1.bf16.msra.mxu0 %v800
      %818 = vmatprep.subr.bf16.mxu0 0
      %819 = vmatpush1.bf16.msra.mxu0 %v801
      %820 = vmatprep.subr.bf16.mxu0 0
      %821 = vmatpush1.bf16.msra.mxu0 %v802
      %822 = vmatprep.subr.bf16.mxu0 0
      %823 = vmatpush1.bf16.msra.mxu0 %v803
      %824 = vmatprep.subr.bf16.mxu0 0
      %825 = vmatpush1.bf16.msra.mxu0 %v804
      %826 = vmatprep.subr.bf16.mxu0 0
      %827 = vmatpush1.bf16.msra.mxu0 %v805
      %828 = vmatprep.subr.bf16.mxu0 0
      %829 = vmatpush1.bf16.msra.mxu0 %v806
      %830 = vmatprep.subr.bf16.mxu0 0
      %831 = vmatpush1.bf16.msra.mxu0 %v807
      %832 = vmatprep.subr.bf16.mxu0 0
      %833 = vmatpush1.bf16.msra.mxu0 0
      %834 = vmatprep.subr.bf16.mxu0 0
      %835 = vmatpush1.bf16.msra.mxu0 0
      %836 = vmatprep.subr.bf16.mxu0 0
      %837 = vmatpush1.bf16.msra.mxu0 0
      %838 = vmatprep.subr.bf16.mxu0 0
      %839 = vmatpush1.bf16.msra.mxu0 0
      %840 = vmatprep.subr.bf16.mxu0 0
      %841 = vmatpush1.bf16.msra.mxu0 0
      %842 = vmatprep.subr.bf16.mxu0 0
      %843 = vmatpush1.bf16.msra.mxu0 0
      %844 = vmatprep.subr.bf16.mxu0 0
      %845 = vmatpush1.bf16.msra.mxu0 0
      %846 = vmatprep.subr.bf16.mxu0 0
      %847 = vmatpush1.bf16.msra.mxu0 0
      %848 = vmatprep.mubr.bf16.mxu0 0
      %849 = vmatmul.mubr.bf16.gmra.mrb[0].mxu0 %v767
      %v850 = vpop.f32.mrb[0].mxu0
      %v851 = vadd.f32 0.0, %v850
      %v852 = vpop.f32.mrb[0].mxu0
      %v853 = vpop.f32.mrb[0].mxu0
      %v854 = vpop.f32.mrb[0].mxu0
      %855 = vdwg.mxu0
      %v856 = vrot.slane %v851, 4
      %v857 = vadd.f32 %v851, %v856
      %v858 = vrot.slane %v857, 2
      %v859 = vadd.f32 %v857, %v858
      %v860 = vrot.slane %v859, 1
      %v861 = vadd.f32 %v859, %v860
      %v862 = vmul.f32 %v861, %v752
      %v863 = vsub.f32 %v851, %v862
      %v864 = vmul.f32 %v863, %v863
      %v865 = vrot.slane %v864, 4
      %v866 = vadd.f32 %v864, %v865
      %v867 = vrot.slane %v866, 2
      %v868 = vadd.f32 %v866, %v867
      %v869 = vrot.slane %v868, 1
      %v870 = vadd.f32 %v868, %v869
      %v871 = vmul.f32 %v870, %v752
      %v872 = vadd.f32 %v871, 1e-05
      %v873 = vrsqrt.pop %v872
      %v874 = vmul.f32 %v863, %v873
      %v876 = vlaneseq
      %v877 = vshrl.u32 %v876, 7
      %v878 = vsub.s32 0, %v877
      %v879 = vrot.slane %v711, %v878
      %v881 = vmul.f32 %v874, %v879
      %v883 = vlaneseq
      %v884 = vshrl.u32 %v883, 7
      %v885 = vsub.s32 0, %v884
      %v886 = vrot.slane %v712, %v885
      %v888 = vadd.f32 %v881, %v886
      %v889 = vmax.f32 %v888, 0.0
      %v890 = vpack.c.bf16 %v889, %v889
      %v907 = vunpack.c.l.b16 %v729
      %v908 = vunpack.c.l.b16 %v730
      %v909 = vunpack.c.l.b16 %v731
      %v910 = vunpack.c.l.b16 %v732
      %v911 = vunpack.c.l.b16 %v733
      %v912 = vunpack.c.l.b16 %v734
      %v913 = vunpack.c.l.b16 %v735
      %v914 = vunpack.c.l.b16 %v736
      %v915 = vunpack.c.l.b16 %v737
      %v916 = vunpack.c.l.b16 %v738
      %v917 = vunpack.c.l.b16 %v739
      %v918 = vunpack.c.l.b16 %v740
      %v919 = vunpack.c.l.b16 %v741
      %v920 = vunpack.c.l.b16 %v742
      %v921 = vunpack.c.l.b16 %v743
      %v922 = vunpack.c.l.b16 %v744
      %v923 = vpack.c.b16 %v908, %v907
      %v924 = vpack.c.b16 %v910, %v909
      %v925 = vpack.c.b16 %v912, %v911
      %v926 = vpack.c.b16 %v914, %v913
      %v927 = vpack.c.b16 %v916, %v915
      %v928 = vpack.c.b16 %v918, %v917
      %v929 = vpack.c.b16 %v920, %v919
      %v930 = vpack.c.b16 %v922, %v921
      %939 = vmatprep.subr.bf16.mxu0 0
      %940 = vmatpush1.bf16.msra.mxu0 %v923
      %941 = vmatprep.subr.bf16.mxu0 0
      %942 = vmatpush1.bf16.msra.mxu0 %v924
      %943 = vmatprep.subr.bf16.mxu0 0
      %944 = vmatpush1.bf16.msra.mxu0 %v925
      %945 = vmatprep.subr.bf16.mxu0 0
      %946 = vmatpush1.bf16.msra.mxu0 %v926
      %947 = vmatprep.subr.bf16.mxu0 0
      %948 = vmatpush1.bf16.msra.mxu0 %v927
      %949 = vmatprep.subr.bf16.mxu0 0
      %950 = vmatpush1.bf16.msra.mxu0 %v928
      %951 = vmatprep.subr.bf16.mxu0 0
      %952 = vmatpush1.bf16.msra.mxu0 %v929
      %953 = vmatprep.subr.bf16.mxu0 0
      %954 = vmatpush1.bf16.msra.mxu0 %v930
      %955 = vmatprep.subr.bf16.mxu0 0
      %956 = vmatpush1.bf16.msra.mxu0 0
      %957 = vmatprep.subr.bf16.mxu0 0
      %958 = vmatpush1.bf16.msra.mxu0 0
      %959 = vmatprep.subr.bf16.mxu0 0
      %960 = vmatpush1.bf16.msra.mxu0 0
      %961 = vmatprep.subr.bf16.mxu0 0
      %962 = vmatpush1.bf16.msra.mxu0 0
      %963 = vmatprep.subr.bf16.mxu0 0
      %964 = vmatpush1.bf16.msra.mxu0 0
      %965 = vmatprep.subr.bf16.mxu0 0
      %966 = vmatpush1.bf16.msra.mxu0 0
      %967 = vmatprep.subr.bf16.mxu0 0
      %968 = vmatpush1.bf16.msra.mxu0 0
      %969 = vmatprep.subr.bf16.mxu0 0
      %970 = vmatpush1.bf16.msra.mxu0 0
      %971 = vmatprep.mubr.bf16.mxu0 0
      %972 = vmatmul.mubr.bf16.gmra.mrb[0].mxu0 %v890
      %v973 = vpop.f32.mrb[0].mxu0
      %v974 = vadd.f32 0.0, %v973
      %v975 = vpop.f32.mrb[0].mxu0
      %v976 = vpop.f32.mrb[0].mxu0
      %v977 = vpop.f32.mrb[0].mxu0
      %978 = vdwg.mxu0
      %979 = vst [vmem:[#allocation10] sm:$0xff] %v974
      %v980 = vld [vmem:[#allocation3] sm:$0xff]
      %v981 = vrot.slane %v980, 4
      %v982 = vadd.f32 %v980, %v981
      %v983 = vrot.slane %v982, 2
      %v984 = vadd.f32 %v982, %v983
      %v985 = vrot.slane %v984, 1
      %v986 = vadd.f32 %v984, %v985
      %v987 = vmul.f32 %v986, %v752
      %v988 = vsub.f32 %v980, %v987
      %v989 = vmul.f32 %v988, %v988
      %v990 = vrot.slane %v989, 4
      %v991 = vadd.f32 %v989, %v990
      %v992 = vrot.slane %v991, 2
      %v993 = vadd.f32 %v991, %v992
      %v994 = vrot.slane %v993, 1
      %v995 = vadd.f32 %v993, %v994
      %v996 = vmul.f32 %v995, %v752
      %v997 = vadd.f32 %v996, 1e-05
      %v998 = vrsqrt.pop %v997
      %v999 = vmul.f32 %v988, %v998
      %1000 = vst [vmem:[#allocation8] sm:$0xff] %v999
      %v1001 = vpack.c.bf16 %v999, %v999
      %1002 = vmatprep.subr.bf16.mxu0 0
      %1003 = vmatpush1.bf16.msra.mxu0 %v800
      %1004 = vmatprep.subr.bf16.mxu0 0
      %1005 = vmatpush1.bf16.msra.mxu0 %v801
      %1006 = vmatprep.subr.bf16.mxu0 0
      %1007 = vmatpush1.bf16.msra.mxu0 %v802
      %1008 = vmatprep.subr.bf16.mxu0 0
      %1009 = vmatpush1.bf16.msra.mxu0 %v803
      %1010 = vmatprep.subr.bf16.mxu0 0
      %1011 = vmatpush1.bf16.msra.mxu0 %v804
      %1012 = vmatprep.subr.bf16.mxu0 0
      %1013 = vmatpush1.bf16.msra.mxu0 %v805
      %1014 = vmatprep.subr.bf16.mxu0 0
      %1015 = vmatpush1.bf16.msra.mxu0 %v806
      %1016 = vmatprep.subr.bf16.mxu0 0
      %1017 = vmatpush1.bf16.msra.mxu0 %v807
      %1018 = vmatprep.subr.bf16.mxu0 0
      %1019 = vmatpush1.bf16.msra.mxu0 0
      %1020 = vmatprep.subr.bf16.mxu0 0
      %1021 = vmatpush1.bf16.msra.mxu0 0
      %1022 = vmatprep.subr.bf16.mxu0 0
      %1023 = vmatpush1.bf16.msra.mxu0 0
      %1024 = vmatprep.subr.bf16.mxu0 0
      %1025 = vmatpush1.bf16.msra.mxu0 0
      %1026 = vmatprep.subr.bf16.mxu0 0
      %1027 = vmatpush1.bf16.msra.mxu0 0
      %1028 = vmatprep.subr.bf16.mxu0 0
      %1029 = vmatpush1.bf16.msra.mxu0 0
      %1030 = vmatprep.subr.bf16.mxu0 0
      %1031 = vmatpush1.bf16.msra.mxu0 0
      %1032 = vmatprep.subr.bf16.mxu0 0
      %1033 = vmatpush1.bf16.msra.mxu0 0
      %1034 = vmatprep.mubr.bf16.mxu0 0
      %1035 = vmatmul.mubr.bf16.gmra.mrb[0].mxu0 %v1001
      %v1036 = vpop.f32.mrb[0].mxu0
      %v1037 = vadd.f32 0.0, %v1036
      %v1038 = vpop.f32.mrb[0].mxu0
      %v1039 = vpop.f32.mrb[0].mxu0
      %v1040 = vpop.f32.mrb[0].mxu0
      %1041 = vdwg.mxu0
      %v1042 = vrot.slane %v1037, 4
      %v1043 = vadd.f32 %v1037, %v1042
      %v1044 = vrot.slane %v1043, 2
      %v1045 = vadd.f32 %v1043, %v1044
      %v1046 = vrot.slane %v1045, 1
      %v1047 = vadd.f32 %v1045, %v1046
      %v1048 = vmul.f32 %v1047, %v752
      %v1049 = vsub.f32 %v1037, %v1048
      %v1050 = vmul.f32 %v1049, %v1049
      %v1051 = vrot.slane %v1050, 4
      %v1052 = vadd.f32 %v1050, %v1051
      %v1053 = vrot.slane %v1052, 2
      %v1054 = vadd.f32 %v1052, %v1053
      %v1055 = vrot.slane %v1054, 1
      %v1056 = vadd.f32 %v1054, %v1055
      %v1057 = vmul.f32 %v1056, %v752
      %v1058 = vadd.f32 %v1057, 1e-05
      %v1059 = vrsqrt.pop %v1058
      %v1060 = vmul.f32 %v1049, %v1059
      %v1061 = vmul.f32 %v1060, %v879
      %v1062 = vadd.f32 %v1061, %v886
      %v1063 = vmax.f32 %v1062, 0.0
      %v1064 = vpack.c.bf16 %v1063, %v1063
      %1065 = vmatprep.subr.bf16.mxu0 0
      %1066 = vmatpush1.bf16.msra.mxu0 %v923
      %1067 = vmatprep.subr.bf16.mxu0 0
      %1068 = vmatpush1.bf16.msra.mxu0 %v924
      %1069 = vmatprep.subr.bf16.mxu0 0
      %1070 = vmatpush1.bf16.msra.mxu0 %v925
      %1071 = vmatprep.subr.bf16.mxu0 0
      %1072 = vmatpush1.bf16.msra.mxu0 %v926
      %1073 = vmatprep.subr.bf16.mxu0 0
      %1074 = vmatpush1.bf16.msra.mxu0 %v927
      %1075 = vmatprep.subr.bf16.mxu0 0
      %1076 = vmatpush1.bf16.msra.mxu0 %v928
      %1077 = vmatprep.subr.bf16.mxu0 0
      %1078 = vmatpush1.bf16.msra.mxu0 %v929
      %1079 = vmatprep.subr.bf16.mxu0 0
      %1080 = vmatpush1.bf16.msra.mxu0 %v930
      %1081 = vmatprep.subr.bf16.mxu0 0
      %1082 = vmatpush1.bf16.msra.mxu0 0
      %1083 = vmatprep.subr.bf16.mxu0 0
      %1084 = vmatpush1.bf16.msra.mxu0 0
      %1085 = vmatprep.subr.bf16.mxu0 0
      %1086 = vmatpush1.bf16.msra.mxu0 0
      %1087 = vmatprep.subr.bf16.mxu0 0
      %1088 = vmatpush1.bf16.msra.mxu0 0
      %1089 = vmatprep.subr.bf16.mxu0 0
      %1090 = vmatpush1.bf16.msra.mxu0 0
      %1091 = vmatprep.subr.bf16.mxu0 0
      %1092 = vmatpush1.bf16.msra.mxu0 0
      %1093 = vmatprep.subr.bf16.mxu0 0
      %1094 = vmatpush1.bf16.msra.mxu0 0
      %1095 = vmatprep.subr.bf16.mxu0 0
      %1096 = vmatpush1.bf16.msra.mxu0 0
      %1097 = vmatprep.mubr.bf16.mxu0 0
      %1098 = vmatmul.mubr.bf16.gmra.mrb[0].mxu0 %v1064
      %v1099 = vpop.f32.mrb[0].mxu0
      %v1100 = vadd.f32 0.0, %v1099
      %v1101 = vpop.f32.mrb[0].mxu0
      %v1102 = vpop.f32.mrb[0].mxu0
      %v1103 = vpop.f32.mrb[0].mxu0
      %1104 = vdwg.mxu0
      %1105 = vst [vmem:[#allocation11] sm:$0xff] %v1100
    $region41: #{_lambda_.1} parent=1 // pred_fallthru
      _
    // Predicated region
    $region42: #{_lambda_.1} parent=1 // pred_check
      _
    $region43: #{_lambda_.1} parent=1 // pred_check_branch
      %1107 = sbr.rel (0) target = $region45
    $region44: #{_lambda_.1} parent=1 // pred_region
      %s1109 = ssub.s32 128, 128
      %1110 = vsyncadd [#allocation6], %s1109
      %s1112 = sshll.u32 [#allocation7], 4
      %s1113 = int_to_ptr.vmem [resolvable:$true] %s1112
      %1115 = dma.vmem_to_hbm [thread:$0]  %s1113, 128, %s7, [#allocation6]
    $region45: #{_lambda_.1} parent=1 // pred_fallthru
      _
    // Predicated region
    $region46: #{_lambda_.1} parent=1 // pred_check
      _
    $region47: #{_lambda_.1} parent=1 // pred_check_branch
      %1117 = sbr.rel (0) target = $region49
    $region48: #{_lambda_.1} parent=1 // pred_region
      %s1119 = ssub.s32 128, 128
      %1120 = vsyncadd [#allocation9], %s1119
      %s1122 = sshll.u32 [#allocation8], 4
      %s1123 = int_to_ptr.vmem [resolvable:$true] %s1122
      %1125 = dma.vmem_to_hbm [thread:$0]  %s1123, 128, %s8, [#allocation9]
    $region49: #{_lambda_.1} parent=1 // pred_fallthru
      _
    // Predicated region
    $region50: #{_lambda_.1} parent=1 // pred_check
      _
    $region51: #{_lambda_.1} parent=1 // pred_check_branch
      %1127 = sbr.rel (0) target = $region53
    $region52: #{_lambda_.1} parent=1 // pred_region
      %s1129 = ssub.s32 128, 128
      %1130 = vsyncadd [#allocation9], %s1129
      %s1132 = sshll.u32 [#allocation10], 4
      %s1133 = int_to_ptr.vmem [resolvable:$true] %s1132
      %1135 = dma.vmem_to_hbm [thread:$0]  %s1133, 128, %s9, [#allocation9]
    $region53: #{_lambda_.1} parent=1 // pred_fallthru
      _
    // Predicated region
    $region54: #{_lambda_.1} parent=1 // pred_check
      _
    $region55: #{_lambda_.1} parent=1 // pred_check_branch
      %1137 = sbr.rel (0) target = $region57
    $region56: #{_lambda_.1} parent=1 // pred_region
      %s1139 = ssub.s32 128, 128
      %1140 = vsyncadd [#allocation12], %s1139
      %s1142 = sshll.u32 [#allocation11], 4
      %s1143 = int_to_ptr.vmem [resolvable:$true] %s1142
      %1145 = dma.vmem_to_hbm [thread:$0]  %s1143, 128, %s10, [#allocation12]
    $region57: #{_lambda_.1} parent=1 // pred_fallthru
      _
    // Predicated region
    $region58: #{_lambda_.1} parent=1 // pred_check
      _
    $region59: #{_lambda_.1} parent=1 // pred_check_branch
      %1147 = sbr.rel (0) target = $region61
    $region60: #{_lambda_.1} parent=1 // pred_region
      %1148 = dma.done [#allocation6], 128
    $region61: #{_lambda_.1} parent=1 // pred_fallthru
      _
    // Predicated region
    $region62: #{_lambda_.1} parent=1 // pred_check
      _
    $region63: #{_lambda_.1} parent=1 // pred_check_branch
      %1150 = sbr.rel (0) target = $region65
    $region64: #{_lambda_.1} parent=1 // pred_region
      %1151 = dma.done [#allocation9], 128
    $region65: #{_lambda_.1} parent=1 // pred_fallthru
      _
    // Predicated region
    $region66: #{_lambda_.1} parent=1 // pred_check
      _
    $region67: #{_lambda_.1} parent=1 // pred_check_branch
      %1153 = sbr.rel (0) target = $region69
    $region68: #{_lambda_.1} parent=1 // pred_region
      %1154 = dma.done [#allocation9], 128
    $region69: #{_lambda_.1} parent=1 // pred_fallthru
      _
    // Predicated region
    $region70: #{_lambda_.1} parent=1 // pred_check
      _
    $region71: #{_lambda_.1} parent=1 // pred_check_branch
      %1156 = sbr.rel (0) target = $region73
    $region72: #{_lambda_.1} parent=1 // pred_region
      %1157 = dma.done [#allocation12], 128
    $region73: #{_lambda_.1} parent=1 // pred_fallthru
      _
    %1158 = vsyncpa [#allocation5], 1
    %1159 = vsyncpa [#allocation6], 1
    %1160 = vsyncpa [#allocation9], 1
    %1161 = vsyncpa [#allocation12], 1

</llo_original>
